<compile_context>
chip_gen: v7x
topology: tpu7x:2x2x1
jax: 0.10.0
libtpu: 0.0.40
codegen_flags: <defaults>
</compile_context>

<pallas_src>
import functools
import math

import jax
import jax.numpy as jnp
from jax.experimental import pallas as pl
from jax.experimental.pallas import tpu as pltpu

_EPS = 1e-5
_CPARAMS = pltpu.CompilerParams(
    dimension_semantics=("parallel",),
    vmem_limit_bytes=32 * 1024 * 1024,
)


# ----------------------------------------------------------------------------
# helpers
# ----------------------------------------------------------------------------

def _ln(x, g, b, eps):
    """Row-wise LayerNorm in f32. g/b are (1, D)."""
    mean = jnp.mean(x, axis=-1, keepdims=True)
    var = jnp.mean((x - mean) ** 2, axis=-1, keepdims=True)
    return (x - mean) * jax.lax.rsqrt(var + eps) * g + b


# ----------------------------------------------------------------------------
# Kernel 1: patch embedding + class/position embedding + pre-LayerNorm
#   patches already include an all-zero leading row so the class-token position
#   falls out of the same matmul (0 @ W == 0); the class embedding is folded
#   into row 0 of `seq_bias` (= pos_emb with class_emb added to row 0).
# ----------------------------------------------------------------------------

def _embed_kernel(patch_ref, w_ref, bias_ref, g_ref, b_ref, o_ref, *, eps):
    pe = jnp.dot(patch_ref[0], w_ref[...],
                 preferred_element_type=jnp.float32)        # (S, D) f32
    rows = pe + bias_ref[...]                                # class + position emb
    o_ref[0] = _ln(rows, g_ref[...], b_ref[...], eps).astype(o_ref.dtype)


def embed_forward(patches, params):
    Nc, S, CPP = patches.shape
    D = params["patch_w"].shape[1]
    return pl.pallas_call(
        functools.partial(_embed_kernel, eps=_EPS),
        out_shape=jax.ShapeDtypeStruct((Nc, S, D), jnp.bfloat16),
        grid=(Nc,),
        in_specs=[
            pl.BlockSpec((1, S, CPP), lambda n: (n, 0, 0)),   # per-crop patches
            pl.BlockSpec((CPP, D), lambda n: (0, 0)),         # conv weight (resident)
            pl.BlockSpec((S, D), lambda n: (0, 0)),           # class+pos bias
            pl.BlockSpec((1, D), lambda n: (0, 0)),           # pre-LN gamma
            pl.BlockSpec((1, D), lambda n: (0, 0)),           # pre-LN beta
        ],
        out_specs=pl.BlockSpec((1, S, D), lambda n: (n, 0, 0)),
        compiler_params=_CPARAMS,
    )(patches, params["patch_w"], params["seq_bias"],
      params["pre_ln_g"], params["pre_ln_b"])


# ----------------------------------------------------------------------------
# Kernel 2: fused attention block
#   LN1 -> packed QKV matmul -> per-head softmax attention -> O-proj -> +resid
# ----------------------------------------------------------------------------

def _attn_block_kernel(h_ref, g_ref, b_ref, wqkv_ref, bqkv_ref, wo_ref, bo_ref,
                       o_ref, *, num_heads, scale, eps):
    h = h_ref[0].astype(jnp.float32)                         # (S, D)
    S, D = h.shape
    Dh = D // num_heads

    x = _ln(h, g_ref[...], b_ref[...], eps)
    qkv = jnp.dot(x.astype(jnp.bfloat16), wqkv_ref[...],
                  preferred_element_type=jnp.float32) + bqkv_ref[...]   # (S, 3D)
    q = qkv[:, 0 * D:1 * D] * scale
    k = qkv[:, 1 * D:2 * D]
    v = qkv[:, 2 * D:3 * D]

    head_outs = []
    for hh in range(num_heads):                              # static unroll
        sl = slice(hh * Dh, (hh + 1) * Dh)
        qh = q[:, sl].astype(jnp.bfloat16)
        kh = k[:, sl].astype(jnp.bfloat16)
        vh = v[:, sl].astype(jnp.bfloat16)
        s = jax.lax.dot_general(qh, kh, (((1,), (1,)), ((), ())),
                                preferred_element_type=jnp.float32)     # (S, S)
        m = jnp.max(s, axis=-1, keepdims=True)
        p = jnp.exp(s - m)
        p = p * pl.reciprocal(jnp.sum(p, axis=-1, keepdims=True), approx=True)
        head_outs.append(jnp.dot(p.astype(jnp.bfloat16), vh,
                                 preferred_element_type=jnp.float32))   # (S, Dh)
    attn = jnp.concatenate(head_outs, axis=-1)               # (S, D), lane-dense

    out = jnp.dot(attn.astype(jnp.bfloat16), wo_ref[...],
                  preferred_element_type=jnp.float32) + bo_ref[...]
    o_ref[0] = (out + h).astype(o_ref.dtype)                 # fused residual


def attn_block_forward(h, p, num_heads):
    Nc, S, D = h.shape
    kernel = functools.partial(_attn_block_kernel, num_heads=num_heads,
                               scale=(D // num_heads) ** -0.5, eps=_EPS)
    return pl.pallas_call(
        kernel,
        out_shape=jax.ShapeDtypeStruct((Nc, S, D), jnp.bfloat16),
        grid=(Nc,),
        in_specs=[
            pl.BlockSpec((1, S, D), lambda n: (n, 0, 0)),     # hidden state
            pl.BlockSpec((1, D), lambda n: (0, 0)),           # ln1 gamma
            pl.BlockSpec((1, D), lambda n: (0, 0)),           # ln1 beta
            pl.BlockSpec((D, 3 * D), lambda n: (0, 0)),       # packed QKV weight
            pl.BlockSpec((1, 3 * D), lambda n: (0, 0)),       # packed QKV bias
            pl.BlockSpec((D, D), lambda n: (0, 0)),           # O-proj weight
            pl.BlockSpec((1, D), lambda n: (0, 0)),           # O-proj bias
        ],
        out_specs=pl.BlockSpec((1, S, D), lambda n: (n, 0, 0)),
        compiler_params=_CPARAMS,
    )(h, p["ln1_g"], p["ln1_b"], p["wqkv"], p["bqkv"], p["wo"], p["bo"])


# ----------------------------------------------------------------------------
# Kernel 3: fused MLP block
#   LN2 -> fc1 + quick_gelu -> fc2 -> +resid  (GELU activation never hits HBM)
# ----------------------------------------------------------------------------

def _mlp_block_kernel(h_ref, g_ref, b_ref, w1_ref, b1_ref, w2_ref, b2_ref,
                      o_ref, *, eps):
    h = h_ref[0].astype(jnp.float32)                         # (S, D)
    x = _ln(h, g_ref[...], b_ref[...], eps)
    y = jnp.dot(x.astype(jnp.bfloat16), w1_ref[...],
                preferred_element_type=jnp.float32) + b1_ref[...]        # (S, F)
    y = y * jax.nn.sigmoid(1.702 * y)                        # quick_gelu
    out = jnp.dot(y.astype(jnp.bfloat16), w2_ref[...],
                  preferred_element_type=jnp.float32) + b2_ref[...]
    o_ref[0] = (out + h).astype(o_ref.dtype)                 # fused residual


def mlp_block_forward(h, p):
    Nc, S, D = h.shape
    F = p["w1"].shape[1]
    return pl.pallas_call(
        functools.partial(_mlp_block_kernel, eps=_EPS),
        out_shape=jax.ShapeDtypeStruct((Nc, S, D), jnp.bfloat16),
        grid=(Nc,),
        in_specs=[
            pl.BlockSpec((1, S, D), lambda n: (n, 0, 0)),
            pl.BlockSpec((1, D), lambda n: (0, 0)),           # ln2 gamma
            pl.BlockSpec((1, D), lambda n: (0, 0)),           # ln2 beta
            pl.BlockSpec((D, F), lambda n: (0, 0)),           # fc1 weight
            pl.BlockSpec((1, F), lambda n: (0, 0)),           # fc1 bias
            pl.BlockSpec((F, D), lambda n: (0, 0)),           # fc2 weight
            pl.BlockSpec((1, D), lambda n: (0, 0)),           # fc2 bias
        ],
        out_specs=pl.BlockSpec((1, S, D), lambda n: (n, 0, 0)),
        compiler_params=_CPARAMS,
    )(h, p["ln2_g"], p["ln2_b"], p["w1"], p["b1"], p["w2"], p["b2"])


# ----------------------------------------------------------------------------
# Mini CLIP vision transformer (HF CLIPVisionModel semantics)
# ----------------------------------------------------------------------------

def init_params(key, *, C, P, D, F, L, S):
    def nrm(k, shape):
        return 0.02 * jax.random.normal(k, shape, jnp.float32)

    keys = jax.random.split(key, 3 + L)
    patch_w = nrm(keys[0], (C * P * P, D))        # conv weight (D,C,P,P) flattened^T
    class_emb = nrm(keys[1], (D,))
    pos_emb = nrm(keys[2], (S, D))
    params = {
        "patch_w": patch_w.astype(jnp.bfloat16),
        "seq_bias": pos_emb.at[0, :].add(class_emb),          # class token folded in
        "pre_ln_g": jnp.ones((1, D), jnp.float32),
        "pre_ln_b": jnp.zeros((1, D), jnp.float32),
        "layers": [],
    }
    for l in range(L):
        kl = jax.random.split(keys[3 + l], 6)
        q_w, k_w, v_w = nrm(kl[0], (D, D)), nrm(kl[1], (D, D)), nrm(kl[2], (D, D))
        params["layers"].append({
            "ln1_g": jnp.ones((1, D), jnp.float32),
            "ln1_b": jnp.zeros((1, D), jnp.float32),
            "wqkv": jnp.concatenate([q_w, k_w, v_w], axis=1).astype(jnp.bfloat16),
            "bqkv": jnp.zeros((1, 3 * D), jnp.float32),
            "wo": nrm(kl[3], (D, D)).astype(jnp.bfloat16),
            "bo": jnp.zeros((1, D), jnp.float32),
            "ln2_g": jnp.ones((1, D), jnp.float32),
            "ln2_b": jnp.zeros((1, D), jnp.float32),
            "w1": nrm(kl[4], (D, F)).astype(jnp.bfloat16),
            "b1": jnp.zeros((1, F), jnp.float32),
            "w2": nrm(kl[5], (F, D)).astype(jnp.bfloat16),
            "b2": jnp.zeros((1, D), jnp.float32),
        })
    return params


def forward_feature(params, images, cfg):
    """CLIPVisionTowerS2.forward_feature: tower -> hidden_states[sel] -> drop CLS."""
    Nc, C, Hc, Wc = images.shape
    P, D = cfg["patch"], cfg["hidden"]
    Hp, Wp = Hc // P, Wc // P
    Np = Hp * Wp

    # conv(stride=P, kernel=P, no bias) == unfold patches (C,kh,kw order) @ W.
    patches = images.reshape(Nc, C, Hp, P, Wp, P).transpose(0, 2, 4, 1, 3, 5)
    patches = patches.reshape(Nc, Np, C * P * P)
    # Prepend an all-zero row for the class-token position (0 @ W == 0), so the
    # embed kernel needs no in-kernel concatenation.
    patches = jnp.concatenate(
        [jnp.zeros((Nc, 1, C * P * P), patches.dtype), patches], axis=1)
    patches = patches.astype(jnp.bfloat16)

    h = embed_forward(patches, params)                         # (Nc, S, D) bf16

    # hidden_states = [embeddings, layer0_out, ..., layer(L-1)_out]; selecting
    # hidden_states[select_layer] only requires running the first `idx` layers
    # (identical output, skips dead compute; select_layer=-2 skips last layer).
    L = len(params["layers"])
    idx = cfg["select_layer"] % (L + 1)
    for layer in params["layers"][:idx]:
        h = attn_block_forward(h, layer, cfg["heads"])
        h = mlp_block_forward(h, layer)

    feat = h[:, 1:, :].astype(jnp.float32)                     # 'patch' feature
    return feat


# ----------------------------------------------------------------------------
# s2wrapper.multiscale_forward semantics (plain-JAX glue, single tower pass)
# ----------------------------------------------------------------------------

def split_chessboard(x, num_split):
    B, C, H, W = x.shape
    h, w = H // num_split, W // num_split
    tiles = [x[:, :, i * h:(i + 1) * h, j * w:(j + 1) * w]
             for i in range(num_split) for j in range(num_split)]
    return jnp.concatenate(tiles, axis=0)


def merge_chessboard(x, num_split):
    B = x.shape[0]
    b = B // (num_split ** 2)
    rows = []
    for i in range(num_split):
        rows.append(jnp.concatenate(
            [x[(i * num_split + j) * b:(i * num_split + j + 1) * b]
             for j in range(num_split)], axis=-1))
    return jnp.concatenate(rows, axis=-2)


def multiscale_forward(forward_fn, images, img_sizes, max_split_size):
    B, C, _, _ = images.shape
    num_splits = [math.ceil(s / max_split_size) for s in img_sizes]

    # Resize + chessboard-split every scale, then batch ALL crops into one
    # tower pass so the encoder weights are DMA'd once, not once per scale.
    crops, counts = [], []
    for size, ns in zip(img_sizes, num_splits):
        # TODO(synk): torch F.interpolate(mode='bicubic', antialias=False) kernel
        # (a=-0.75) differs slightly from jax.image.resize 'bicubic' (Keys a=-0.5);
        # numerics are close, not bit-exact.
        x = jax.image.resize(images.astype(jnp.float32), (B, C, size, size),
                             method="bicubic")
        x = split_chessboard(x, ns)                            # (B*ns^2, C, sp, sp)
        crops.append(x)
        counts.append(x.shape[0])
    all_crops = jnp.concatenate(crops, axis=0)
    all_feats = forward_fn(all_crops)                          # (sum crops, Np, D)

    outs, off = [], 0
    for ns, cnt in zip(num_splits, counts):
        feat = all_feats[off:off + cnt]
        off += cnt
        side = int(round(feat.shape[1] ** 0.5))
        feat = feat.transpose(0, 2, 1).reshape(cnt, feat.shape[2], side, side)
        outs.append(merge_chessboard(feat, ns))                # (B, D, side*ns, side*ns)

    out_size = outs[0].shape[-2]
    pooled = []
    for feat in outs:
        f = feat.shape[-2] // out_size                         # 'area' pool == avg pool
        Bf, Cf, _, _ = feat.shape
        pooled.append(feat.reshape(Bf, Cf, out_size, f, out_size, f).mean(axis=(3, 5)))
    out = jnp.concatenate(pooled, axis=1)                      # (B, D*n_scales, o, o)
    out = out.reshape(out.shape[0], out.shape[1], -1).transpose(0, 2, 1)  # b (h w) c
    return out


# ----------------------------------------------------------------------------
# main
# ----------------------------------------------------------------------------

if __name__ == "__main__":
    # Small-scale analog of CLIPVisionTowerS2 with scales 336/672/1008 -> 16/32/48.
    cfg = {
        "patch": 8,       # patch_size
        "hidden": 64,     # hidden_size
        "heads": 4,
        "inter": 256,     # intermediate_size
        "layers": 2,
        "select_layer": -2,
    }
    s2_scales = [16, 32, 48]
    s2_split_size = s2_scales[0]
    s2_image_size = s2_scales[-1]

    B, C = 2, 3
    seq_len = (s2_split_size // cfg["patch"]) ** 2 + 1         # patches + CLS

    key = jax.random.PRNGKey(0)
    k_param, k_img = jax.random.split(key)
    params = init_params(k_param, C=C, P=cfg["patch"], D=cfg["hidden"],
                         F=cfg["inter"], L=cfg["layers"], S=seq_len)
    images = jax.random.normal(k_img, (B, C, s2_image_size, s2_image_size), jnp.float32)

    @jax.jit
    def run(imgs):
        return multiscale_forward(
            lambda x: forward_feature(params, x, cfg),
            imgs, img_sizes=s2_scales, max_split_size=s2_split_size)

    feats = jax.block_until_ready(run(images))

    n_patches = (s2_split_size // cfg["patch"]) ** 2
    hidden_size = cfg["hidden"] * len(s2_scales)               # CLIPVisionTowerS2.hidden_size
    assert feats.shape == (B, n_patches, hidden_size), feats.shape
    assert feats.dtype == jnp.float32
    assert bool(jnp.all(jnp.isfinite(feats)))
    print("KERNEL_OK")
</pallas_src>

<mosaic_0001>
module attributes {stable_mosaic.version = 11 : i64} {
  func.func @_embed_kernel(%arg0: i32, %arg1: memref<1x5x192xbf16, #tpu.memory_space<vmem>>, %arg2: memref<192x64xbf16, #tpu.memory_space<vmem>>, %arg3: memref<5x64xf32, #tpu.memory_space<vmem>>, %arg4: memref<1x64xf32, #tpu.memory_space<vmem>>, %arg5: memref<1x64xf32, #tpu.memory_space<vmem>>, %arg6: memref<1x5x64xbf16, #tpu.memory_space<vmem>>) attributes {dimension_semantics = [#tpu.dimension_semantics<parallel>], iteration_bounds = array<i64: 28>, scalar_prefetch = 0 : i64, scratch_operands = 0 : i64, tpu.core_type = #tpu.core_type<tc>, window_params = [{transform_indices = @transform_0, window_bounds = array<i64: 1, 5, 192>}, {pipeline_mode = #tpu.pipeline_mode<synchronous>, transform_indices = @transform_1, window_bounds = array<i64: 192, 64>}, {pipeline_mode = #tpu.pipeline_mode<synchronous>, transform_indices = @transform_2, window_bounds = array<i64: 5, 64>}, {pipeline_mode = #tpu.pipeline_mode<synchronous>, transform_indices = @transform_3, window_bounds = array<i64: 1, 64>}, {pipeline_mode = #tpu.pipeline_mode<synchronous>, transform_indices = @transform_4, window_bounds = array<i64: 1, 64>}, {transform_indices = @transform_5, window_bounds = array<i64: 1, 5, 64>}]} {
    %c0 = arith.constant 0 : index
    %c0_0 = arith.constant 0 : index
    %c0_1 = arith.constant 0 : index
    %0 = vector.load %arg1[%c0, %c0_0, %c0_1] : memref<1x5x192xbf16, #tpu.memory_space<vmem>>, vector<1x5x192xbf16>
    %1 = vector.shape_cast %0 : vector<1x5x192xbf16> to vector<5x192xbf16>
    %c0_2 = arith.constant 0 : index
    %c0_3 = arith.constant 0 : index
    %2 = vector.load %arg2[%c0_2, %c0_3] : memref<192x64xbf16, #tpu.memory_space<vmem>>, vector<192x64xbf16>
    %cst = arith.constant dense<0.000000e+00> : vector<5x64xf32>
    %3 = tpu.matmul %1, %2, %cst {dimension_numbers = #tpu.dot_dimension_numbers<[1], [0], [0], [1], [0, 0, 1, 1], [], []>} : vector<5x192xbf16>, vector<192x64xbf16>, vector<5x64xf32> -> vector<5x64xf32>
    %c0_4 = arith.constant 0 : index
    %c0_5 = arith.constant 0 : index
    %4 = vector.load %arg3[%c0_4, %c0_5] : memref<5x64xf32, #tpu.memory_space<vmem>>, vector<5x64xf32>
    %5 = arith.addf %3, %4 : vector<5x64xf32>
    %c0_6 = arith.constant 0 : index
    %c0_7 = arith.constant 0 : index
    %6 = vector.load %arg4[%c0_6, %c0_7] : memref<1x64xf32, #tpu.memory_space<vmem>>, vector<1x64xf32>
    %c0_8 = arith.constant 0 : index
    %c0_9 = arith.constant 0 : index
    %7 = vector.load %arg5[%c0_8, %c0_9] : memref<1x64xf32, #tpu.memory_space<vmem>>, vector<1x64xf32>
    %cst_10 = arith.constant dense<0.000000e+00> : vector<5xf32>
    %8 = vector.multi_reduction <add>, %5, %cst_10 [1] : vector<5x64xf32> to vector<5xf32>
    %9 = vector.shape_cast %8 : vector<5xf32> to vector<5x1xf32>
    %cst_11 = arith.constant 6.400000e+01 : f32
    %10 = vector.broadcast %cst_11 : f32 to vector<5x1xf32>
    %11 = arith.divf %9, %10 : vector<5x1xf32>
    %12 = vector.broadcast %11 : vector<5x1xf32> to vector<5x64xf32>
    %13 = arith.subf %5, %12 : vector<5x64xf32>
    %14 = arith.mulf %13, %13 : vector<5x64xf32>
    %cst_12 = arith.constant dense<0.000000e+00> : vector<5xf32>
    %15 = vector.multi_reduction <add>, %14, %cst_12 [1] : vector<5x64xf32> to vector<5xf32>
    %16 = vector.shape_cast %15 : vector<5xf32> to vector<5x1xf32>
    %cst_13 = arith.constant 6.400000e+01 : f32
    %17 = vector.broadcast %cst_13 : f32 to vector<5x1xf32>
    %18 = arith.divf %16, %17 : vector<5x1xf32>
    %19 = vector.broadcast %11 : vector<5x1xf32> to vector<5x64xf32>
    %20 = arith.subf %5, %19 : vector<5x64xf32>
    %cst_14 = arith.constant 9.99999974E-6 : f32
    %21 = vector.broadcast %cst_14 : f32 to vector<5x1xf32>
    %22 = arith.addf %18, %21 : vector<5x1xf32>
    %23 = math.rsqrt %22 : vector<5x1xf32>
    %24 = vector.broadcast %23 : vector<5x1xf32> to vector<5x64xf32>
    %25 = arith.mulf %20, %24 : vector<5x64xf32>
    %26 = vector.broadcast %6 : vector<1x64xf32> to vector<5x64xf32>
    %27 = arith.mulf %25, %26 : vector<5x64xf32>
    %28 = vector.broadcast %7 : vector<1x64xf32> to vector<5x64xf32>
    %29 = arith.addf %27, %28 : vector<5x64xf32>
    %30 = arith.truncf %29 : vector<5x64xf32> to vector<5x64xbf16>
    %c0_15 = arith.constant 0 : index
    %c0_16 = arith.constant 0 : index
    %c0_17 = arith.constant 0 : index
    %31 = vector.load %arg6[%c0_15, %c0_16, %c0_17] : memref<1x5x64xbf16, #tpu.memory_space<vmem>>, vector<1x5x64xbf16>
    %32 = vector.shape_cast %31 : vector<1x5x64xbf16> to vector<5x64xbf16>
    %33 = vector.shape_cast %30 : vector<5x64xbf16> to vector<1x5x64xbf16>
    tpu.vector_store %arg6[%c0_15, %c0_16, %c0_17], %33 {strides = array<i32>} : memref<1x5x64xbf16, #tpu.memory_space<vmem>>, vector<1x5x64xbf16>,
    return
  }
  func.func @transform_0(%arg0: i32) -> (i32, i32, i32) {
    %c0_i32 = arith.constant 0 : i32
    %c0_i32_0 = arith.constant 0 : i32
    %c0_i32_1 = arith.constant 0 : i32
    return %arg0, %c0_i32, %c0_i32_0 : i32, i32, i32
  }
  func.func @transform_1(%arg0: i32) -> (i32, i32) {
    %c0_i32 = arith.constant 0 : i32
    %c0_i32_0 = arith.constant 0 : i32
    %c0_i32_1 = arith.constant 0 : i32
    return %c0_i32, %c0_i32_0 : i32, i32
  }
  func.func @transform_2(%arg0: i32) -> (i32, i32) {
    %c0_i32 = arith.constant 0 : i32
    %c0_i32_0 = arith.constant 0 : i32
    %c0_i32_1 = arith.constant 0 : i32
    return %c0_i32, %c0_i32_0 : i32, i32
  }
  func.func @transform_3(%arg0: i32) -> (i32, i32) {
    %c0_i32 = arith.constant 0 : i32
    %c0_i32_0 = arith.constant 0 : i32
    %c0_i32_1 = arith.constant 0 : i32
    return %c0_i32, %c0_i32_0 : i32, i32
  }
  func.func @transform_4(%arg0: i32) -> (i32, i32) {
    %c0_i32 = arith.constant 0 : i32
    %c0_i32_0 = arith.constant 0 : i32
    %c0_i32_1 = arith.constant 0 : i32
    return %c0_i32, %c0_i32_0 : i32, i32
  }
  func.func @transform_5(%arg0: i32) -> (i32, i32, i32) {
    %c0_i32 = arith.constant 0 : i32
    %c0_i32_0 = arith.constant 0 : i32
    %c0_i32_1 = arith.constant 0 : i32
    return %arg0, %c0_i32, %c0_i32_0 : i32, i32, i32
  }
}

module attributes {stable_mosaic.version = 11 : i64} {
  func.func @_mlp_block_kernel(%arg0: i32, %arg1: memref<1x5x64xbf16, #tpu.memory_space<vmem>>, %arg2: memref<1x64xf32, #tpu.memory_space<vmem>>, %arg3: memref<1x64xf32, #tpu.memory_space<vmem>>, %arg4: memref<64x256xbf16, #tpu.memory_space<vmem>>, %arg5: memref<1x256xf32, #tpu.memory_space<vmem>>, %arg6: memref<256x64xbf16, #tpu.memory_space<vmem>>, %arg7: memref<1x64xf32, #tpu.memory_space<vmem>>, %arg8: memref<1x5x64xbf16, #tpu.memory_space<vmem>>) attributes {dimension_semantics = [#tpu.dimension_semantics<parallel>], iteration_bounds = array<i64: 28>, scalar_prefetch = 0 : i64, scratch_operands = 0 : i64, tpu.core_type = #tpu.core_type<tc>, window_params = [{transform_indices = @transform_0, window_bounds = array<i64: 1, 5, 64>}, {pipeline_mode = #tpu.pipeline_mode<synchronous>, transform_indices = @transform_1, window_bounds = array<i64: 1, 64>}, {pipeline_mode = #tpu.pipeline_mode<synchronous>, transform_indices = @transform_2, window_bounds = array<i64: 1, 64>}, {pipeline_mode = #tpu.pipeline_mode<synchronous>, transform_indices = @transform_3, window_bounds = array<i64: 64, 256>}, {pipeline_mode = #tpu.pipeline_mode<synchronous>, transform_indices = @transform_4, window_bounds = array<i64: 1, 256>}, {pipeline_mode = #tpu.pipeline_mode<synchronous>, transform_indices = @transform_5, window_bounds = array<i64: 256, 64>}, {pipeline_mode = #tpu.pipeline_mode<synchronous>, transform_indices = @transform_6, window_bounds = array<i64: 1, 64>}, {transform_indices = @transform_7, window_bounds = array<i64: 1, 5, 64>}]} {
    %c0 = arith.constant 0 : index
    %c0_0 = arith.constant 0 : index
    %c0_1 = arith.constant 0 : index
    %0 = vector.load %arg1[%c0, %c0_0, %c0_1] : memref<1x5x64xbf16, #tpu.memory_space<vmem>>, vector<1x5x64xbf16>
    %1 = vector.shape_cast %0 : vector<1x5x64xbf16> to vector<5x64xbf16>
    %2 = arith.extf %1 : vector<5x64xbf16> to vector<5x64xf32>
    %c0_2 = arith.constant 0 : index
    %c0_3 = arith.constant 0 : index
    %3 = vector.load %arg2[%c0_2, %c0_3] : memref<1x64xf32, #tpu.memory_space<vmem>>, vector<1x64xf32>
    %c0_4 = arith.constant 0 : index
    %c0_5 = arith.constant 0 : index
    %4 = vector.load %arg3[%c0_4, %c0_5] : memref<1x64xf32, #tpu.memory_space<vmem>>, vector<1x64xf32>
    %cst = arith.constant dense<0.000000e+00> : vector<5xf32>
    %5 = vector.multi_reduction <add>, %2, %cst [1] : vector<5x64xf32> to vector<5xf32>
    %6 = vector.shape_cast %5 : vector<5xf32> to vector<5x1xf32>
    %cst_6 = arith.constant 6.400000e+01 : f32
    %7 = vector.broadcast %cst_6 : f32 to vector<5x1xf32>
    %8 = arith.divf %6, %7 : vector<5x1xf32>
    %9 = vector.broadcast %8 : vector<5x1xf32> to vector<5x64xf32>
    %10 = arith.subf %2, %9 : vector<5x64xf32>
    %11 = arith.mulf %10, %10 : vector<5x64xf32>
    %cst_7 = arith.constant dense<0.000000e+00> : vector<5xf32>
    %12 = vector.multi_reduction <add>, %11, %cst_7 [1] : vector<5x64xf32> to vector<5xf32>
    %13 = vector.shape_cast %12 : vector<5xf32> to vector<5x1xf32>
    %cst_8 = arith.constant 6.400000e+01 : f32
    %14 = vector.broadcast %cst_8 : f32 to vector<5x1xf32>
    %15 = arith.divf %13, %14 : vector<5x1xf32>
    %16 = vector.broadcast %8 : vector<5x1xf32> to vector<5x64xf32>
    %17 = arith.subf %2, %16 : vector<5x64xf32>
    %cst_9 = arith.constant 9.99999974E-6 : f32
    %18 = vector.broadcast %cst_9 : f32 to vector<5x1xf32>
    %19 = arith.addf %15, %18 : vector<5x1xf32>
    %20 = math.rsqrt %19 : vector<5x1xf32>
    %21 = vector.broadcast %20 : vector<5x1xf32> to vector<5x64xf32>
    %22 = arith.mulf %17, %21 : vector<5x64xf32>
    %23 = vector.broadcast %3 : vector<1x64xf32> to vector<5x64xf32>
    %24 = arith.mulf %22, %23 : vector<5x64xf32>
    %25 = vector.broadcast %4 : vector<1x64xf32> to vector<5x64xf32>
    %26 = arith.addf %24, %25 : vector<5x64xf32>
    %27 = arith.truncf %26 : vector<5x64xf32> to vector<5x64xbf16>
    %c0_10 = arith.constant 0 : index
    %c0_11 = arith.constant 0 : index
    %28 = vector.load %arg4[%c0_10, %c0_11] : memref<64x256xbf16, #tpu.memory_space<vmem>>, vector<64x256xbf16>
    %cst_12 = arith.constant dense<0.000000e+00> : vector<5x256xf32>
    %29 = tpu.matmul %27, %28, %cst_12 {dimension_numbers = #tpu.dot_dimension_numbers<[1], [0], [0], [1], [0, 0, 1, 1], [], []>} : vector<5x64xbf16>, vector<64x256xbf16>, vector<5x256xf32> -> vector<5x256xf32>
    %c0_13 = arith.constant 0 : index
    %c0_14 = arith.constant 0 : index
    %30 = vector.load %arg5[%c0_13, %c0_14] : memref<1x256xf32, #tpu.memory_space<vmem>>, vector<1x256xf32>
    %31 = vector.broadcast %30 : vector<1x256xf32> to vector<5x256xf32>
    %32 = arith.addf %29, %31 : vector<5x256xf32>
    %cst_15 = arith.constant 1.702000e+00 : f32
    %33 = vector.broadcast %cst_15 : f32 to vector<5x256xf32>
    %34 = arith.mulf %33, %32 : vector<5x256xf32>
    %35 = arith.negf %34 : vector<5x256xf32>
    %36 = math.exp %35 : vector<5x256xf32>
    %cst_16 = arith.constant 1.000000e+00 : f32
    %37 = vector.broadcast %cst_16 : f32 to vector<5x256xf32>
    %38 = arith.addf %37, %36 : vector<5x256xf32>
    %39 = arith.divf %37, %38 : vector<5x256xf32>
    %40 = arith.mulf %32, %39 : vector<5x256xf32>
    %41 = arith.truncf %40 : vector<5x256xf32> to vector<5x256xbf16>
    %c0_17 = arith.constant 0 : index
    %c0_18 = arith.constant 0 : index
    %42 = vector.load %arg6[%c0_17, %c0_18] : memref<256x64xbf16, #tpu.memory_space<vmem>>, vector<256x64xbf16>
    %cst_19 = arith.constant dense<0.000000e+00> : vector<5x64xf32>
    %43 = tpu.matmul %41, %42, %cst_19 {dimension_numbers = #tpu.dot_dimension_numbers<[1], [0], [0], [1], [0, 0, 1, 1], [], []>} : vector<5x256xbf16>, vector<256x64xbf16>, vector<5x64xf32> -> vector<5x64xf32>
    %c0_20 = arith.constant 0 : index
    %c0_21 = arith.constant 0 : index
    %44 = vector.load %arg7[%c0_20, %c0_21] : memref<1x64xf32, #tpu.memory_space<vmem>>, vector<1x64xf32>
    %45 = vector.broadcast %44 : vector<1x64xf32> to vector<5x64xf32>
    %46 = arith.addf %43, %45 : vector<5x64xf32>
    %47 = arith.addf %46, %2 : vector<5x64xf32>
    %48 = arith.truncf %47 : vector<5x64xf32> to vector<5x64xbf16>
    %c0_22 = arith.constant 0 : index
    %c0_23 = arith.constant 0 : index
    %c0_24 = arith.constant 0 : index
    %49 = vector.load %arg8[%c0_22, %c0_23, %c0_24] : memref<1x5x64xbf16, #tpu.memory_space<vmem>>, vector<1x5x64xbf16>
    %50 = vector.shape_cast %49 : vector<1x5x64xbf16> to vector<5x64xbf16>
    %51 = vector.shape_cast %48 : vector<5x64xbf16> to vector<1x5x64xbf16>
    tpu.vector_store %arg8[%c0_22, %c0_23, %c0_24], %51 {strides = array<i32>} : memref<1x5x64xbf16, #tpu.memory_space<vmem>>, vector<1x5x64xbf16>,
    return
  }
  func.func @transform_0(%arg0: i32) -> (i32, i32, i32) {
    %c0_i32 = arith.constant 0 : i32
    %c0_i32_0 = arith.constant 0 : i32
    %c0_i32_1 = arith.constant 0 : i32
    return %arg0, %c0_i32, %c0_i32_0 : i32, i32, i32
  }
  func.func @transform_1(%arg0: i32) -> (i32, i32) {
    %c0_i32 = arith.constant 0 : i32
    %c0_i32_0 = arith.constant 0 : i32
    %c0_i32_1 = arith.constant 0 : i32
    return %c0_i32, %c0_i32_0 : i32, i32
  }
  func.func @transform_2(%arg0: i32) -> (i32, i32) {
    %c0_i32 = arith.constant 0 : i32
    %c0_i32_0 = arith.constant 0 : i32
    %c0_i32_1 = arith.constant 0 : i32
    return %c0_i32, %c0_i32_0 : i32, i32
  }
  func.func @transform_3(%arg0: i32) -> (i32, i32) {
    %c0_i32 = arith.constant 0 : i32
    %c0_i32_0 = arith.constant 0 : i32
    %c0_i32_1 = arith.constant 0 : i32
    return %c0_i32, %c0_i32_0 : i32, i32
  }
  func.func @transform_4(%arg0: i32) -> (i32, i32) {
    %c0_i32 = arith.constant 0 : i32
    %c0_i32_0 = arith.constant 0 : i32
    %c0_i32_1 = arith.constant 0 : i32
    return %c0_i32, %c0_i32_0 : i32, i32
  }
  func.func @transform_5(%arg0: i32) -> (i32, i32) {
    %c0_i32 = arith.constant 0 : i32
    %c0_i32_0 = arith.constant 0 : i32
    %c0_i32_1 = arith.constant 0 : i32
    return %c0_i32, %c0_i32_0 : i32, i32
  }
  func.func @transform_6(%arg0: i32) -> (i32, i32) {
    %c0_i32 = arith.constant 0 : i32
    %c0_i32_0 = arith.constant 0 : i32
    %c0_i32_1 = arith.constant 0 : i32
    return %c0_i32, %c0_i32_0 : i32, i32
  }
  func.func @transform_7(%arg0: i32) -> (i32, i32, i32) {
    %c0_i32 = arith.constant 0 : i32
    %c0_i32_0 = arith.constant 0 : i32
    %c0_i32_1 = arith.constant 0 : i32
    return %arg0, %c0_i32, %c0_i32_0 : i32, i32, i32
  }
}

module attributes {stable_mosaic.version = 11 : i64} {
  func.func @_attn_block_kernel(%arg0: i32, %arg1: memref<1x5x64xbf16, #tpu.memory_space<vmem>>, %arg2: memref<1x64xf32, #tpu.memory_space<vmem>>, %arg3: memref<1x64xf32, #tpu.memory_space<vmem>>, %arg4: memref<64x192xbf16, #tpu.memory_space<vmem>>, %arg5: memref<1x192xf32, #tpu.memory_space<vmem>>, %arg6: memref<64x64xbf16, #tpu.memory_space<vmem>>, %arg7: memref<1x64xf32, #tpu.memory_space<vmem>>, %arg8: memref<1x5x64xbf16, #tpu.memory_space<vmem>>) attributes {dimension_semantics = [#tpu.dimension_semantics<parallel>], iteration_bounds = array<i64: 28>, scalar_prefetch = 0 : i64, scratch_operands = 0 : i64, tpu.core_type = #tpu.core_type<tc>, window_params = [{transform_indices = @transform_0, window_bounds = array<i64: 1, 5, 64>}, {pipeline_mode = #tpu.pipeline_mode<synchronous>, transform_indices = @transform_1, window_bounds = array<i64: 1, 64>}, {pipeline_mode = #tpu.pipeline_mode<synchronous>, transform_indices = @transform_2, window_bounds = array<i64: 1, 64>}, {pipeline_mode = #tpu.pipeline_mode<synchronous>, transform_indices = @transform_3, window_bounds = array<i64: 64, 192>}, {pipeline_mode = #tpu.pipeline_mode<synchronous>, transform_indices = @transform_4, window_bounds = array<i64: 1, 192>}, {pipeline_mode = #tpu.pipeline_mode<synchronous>, transform_indices = @transform_5, window_bounds = array<i64: 64, 64>}, {pipeline_mode = #tpu.pipeline_mode<synchronous>, transform_indices = @transform_6, window_bounds = array<i64: 1, 64>}, {transform_indices = @transform_7, window_bounds = array<i64: 1, 5, 64>}]} {
    %c0 = arith.constant 0 : index
    %c0_0 = arith.constant 0 : index
    %c0_1 = arith.constant 0 : index
    %0 = vector.load %arg1[%c0, %c0_0, %c0_1] : memref<1x5x64xbf16, #tpu.memory_space<vmem>>, vector<1x5x64xbf16>
    %1 = vector.shape_cast %0 : vector<1x5x64xbf16> to vector<5x64xbf16>
    %2 = arith.extf %1 : vector<5x64xbf16> to vector<5x64xf32>
    %c0_2 = arith.constant 0 : index
    %c0_3 = arith.constant 0 : index
    %3 = vector.load %arg2[%c0_2, %c0_3] : memref<1x64xf32, #tpu.memory_space<vmem>>, vector<1x64xf32>
    %c0_4 = arith.constant 0 : index
    %c0_5 = arith.constant 0 : index
    %4 = vector.load %arg3[%c0_4, %c0_5] : memref<1x64xf32, #tpu.memory_space<vmem>>, vector<1x64xf32>
    %cst = arith.constant dense<0.000000e+00> : vector<5xf32>
    %5 = vector.multi_reduction <add>, %2, %cst [1] : vector<5x64xf32> to vector<5xf32>
    %6 = vector.shape_cast %5 : vector<5xf32> to vector<5x1xf32>
    %cst_6 = arith.constant 6.400000e+01 : f32
    %7 = vector.broadcast %cst_6 : f32 to vector<5x1xf32>
    %8 = arith.divf %6, %7 : vector<5x1xf32>
    %9 = vector.broadcast %8 : vector<5x1xf32> to vector<5x64xf32>
    %10 = arith.subf %2, %9 : vector<5x64xf32>
    %11 = arith.mulf %10, %10 : vector<5x64xf32>
    %cst_7 = arith.constant dense<0.000000e+00> : vector<5xf32>
    %12 = vector.multi_reduction <add>, %11, %cst_7 [1] : vector<5x64xf32> to vector<5xf32>
    %13 = vector.shape_cast %12 : vector<5xf32> to vector<5x1xf32>
    %cst_8 = arith.constant 6.400000e+01 : f32
    %14 = vector.broadcast %cst_8 : f32 to vector<5x1xf32>
    %15 = arith.divf %13, %14 : vector<5x1xf32>
    %16 = vector.broadcast %8 : vector<5x1xf32> to vector<5x64xf32>
    %17 = arith.subf %2, %16 : vector<5x64xf32>
    %cst_9 = arith.constant 9.99999974E-6 : f32
    %18 = vector.broadcast %cst_9 : f32 to vector<5x1xf32>
    %19 = arith.addf %15, %18 : vector<5x1xf32>
    %20 = math.rsqrt %19 : vector<5x1xf32>
    %21 = vector.broadcast %20 : vector<5x1xf32> to vector<5x64xf32>
    %22 = arith.mulf %17, %21 : vector<5x64xf32>
    %23 = vector.broadcast %3 : vector<1x64xf32> to vector<5x64xf32>
    %24 = arith.mulf %22, %23 : vector<5x64xf32>
    %25 = vector.broadcast %4 : vector<1x64xf32> to vector<5x64xf32>
    %26 = arith.addf %24, %25 : vector<5x64xf32>
    %27 = arith.truncf %26 : vector<5x64xf32> to vector<5x64xbf16>
    %c0_10 = arith.constant 0 : index
    %c0_11 = arith.constant 0 : index
    %28 = vector.load %arg4[%c0_10, %c0_11] : memref<64x192xbf16, #tpu.memory_space<vmem>>, vector<64x192xbf16>
    %cst_12 = arith.constant dense<0.000000e+00> : vector<5x192xf32>
    %29 = tpu.matmul %27, %28, %cst_12 {dimension_numbers = #tpu.dot_dimension_numbers<[1], [0], [0], [1], [0, 0, 1, 1], [], []>} : vector<5x64xbf16>, vector<64x192xbf16>, vector<5x192xf32> -> vector<5x192xf32>
    %c0_13 = arith.constant 0 : index
    %c0_14 = arith.constant 0 : index
    %30 = vector.load %arg5[%c0_13, %c0_14] : memref<1x192xf32, #tpu.memory_space<vmem>>, vector<1x192xf32>
    %31 = vector.broadcast %30 : vector<1x192xf32> to vector<5x192xf32>
    %32 = arith.addf %29, %31 : vector<5x192xf32>
    %33 = vector.extract_strided_slice %32 {offsets = [0, 0], sizes = [5, 64], strides = [1, 1]} : vector<5x192xf32> to vector<5x64xf32>
    %cst_15 = arith.constant 2.500000e-01 : f32
    %34 = vector.broadcast %cst_15 : f32 to vector<5x64xf32>
    %35 = arith.mulf %33, %34 : vector<5x64xf32>
    %36 = vector.extract_strided_slice %32 {offsets = [0, 64], sizes = [5, 64], strides = [1, 1]} : vector<5x192xf32> to vector<5x64xf32>
    %37 = vector.extract_strided_slice %32 {offsets = [0, 128], sizes = [5, 64], strides = [1, 1]} : vector<5x192xf32> to vector<5x64xf32>
    %38 = vector.extract_strided_slice %35 {offsets = [0, 0], sizes = [5, 16], strides = [1, 1]} : vector<5x64xf32> to vector<5x16xf32>
    %39 = arith.truncf %38 : vector<5x16xf32> to vector<5x16xbf16>
    %40 = vector.extract_strided_slice %36 {offsets = [0, 0], sizes = [5, 16], strides = [1, 1]} : vector<5x64xf32> to vector<5x16xf32>
    %41 = arith.truncf %40 : vector<5x16xf32> to vector<5x16xbf16>
    %42 = vector.extract_strided_slice %37 {offsets = [0, 0], sizes = [5, 16], strides = [1, 1]} : vector<5x64xf32> to vector<5x16xf32>
    %43 = arith.truncf %42 : vector<5x16xf32> to vector<5x16xbf16>
    %cst_16 = arith.constant dense<0.000000e+00> : vector<5x5xf32>
    %44 = tpu.matmul %39, %41, %cst_16 {dimension_numbers = #tpu.dot_dimension_numbers<[1], [1], [0], [0], [0, 0, 1, 0], [], []>} : vector<5x16xbf16>, vector<5x16xbf16>, vector<5x5xf32> -> vector<5x5xf32>
    %cst_17 = arith.constant dense<0xFF800000> : vector<5xf32>
    %45 = vector.multi_reduction <maximumf>, %44, %cst_17 [1] : vector<5x5xf32> to vector<5xf32>
    %46 = vector.shape_cast %45 : vector<5xf32> to vector<5x1xf32>
    %47 = vector.broadcast %46 : vector<5x1xf32> to vector<5x5xf32>
    %48 = arith.subf %44, %47 : vector<5x5xf32>
    %49 = math.exp %48 : vector<5x5xf32>
    %cst_18 = arith.constant dense<0.000000e+00> : vector<5xf32>
    %50 = vector.multi_reduction <add>, %49, %cst_18 [1] : vector<5x5xf32> to vector<5xf32>
    %51 = vector.shape_cast %50 : vector<5xf32> to vector<5x1xf32>
    %52 = tpu.reciprocal %51 {approx = true} : vector<5x1xf32> -> vector<5x1xf32>
    %53 = vector.broadcast %52 : vector<5x1xf32> to vector<5x5xf32>
    %54 = arith.mulf %49, %53 : vector<5x5xf32>
    %55 = arith.truncf %54 : vector<5x5xf32> to vector<5x5xbf16>
    %cst_19 = arith.constant dense<0.000000e+00> : vector<5x16xf32>
    %56 = tpu.matmul %55, %43, %cst_19 {dimension_numbers = #tpu.dot_dimension_numbers<[1], [0], [0], [1], [0, 0, 1, 1], [], []>} : vector<5x5xbf16>, vector<5x16xbf16>, vector<5x16xf32> -> vector<5x16xf32>
    %57 = vector.extract_strided_slice %35 {offsets = [0, 16], sizes = [5, 16], strides = [1, 1]} : vector<5x64xf32> to vector<5x16xf32>
    %58 = arith.truncf %57 : vector<5x16xf32> to vector<5x16xbf16>
    %59 = vector.extract_strided_slice %36 {offsets = [0, 16], sizes = [5, 16], strides = [1, 1]} : vector<5x64xf32> to vector<5x16xf32>
    %60 = arith.truncf %59 : vector<5x16xf32> to vector<5x16xbf16>
    %61 = vector.extract_strided_slice %37 {offsets = [0, 16], sizes = [5, 16], strides = [1, 1]} : vector<5x64xf32> to vector<5x16xf32>
    %62 = arith.truncf %61 : vector<5x16xf32> to vector<5x16xbf16>
    %cst_20 = arith.constant dense<0.000000e+00> : vector<5x5xf32>
    %63 = tpu.matmul %58, %60, %cst_20 {dimension_numbers = #tpu.dot_dimension_numbers<[1], [1], [0], [0], [0, 0, 1, 0], [], []>} : vector<5x16xbf16>, vector<5x16xbf16>, vector<5x5xf32> -> vector<5x5xf32>
    %cst_21 = arith.constant dense<0xFF800000> : vector<5xf32>
    %64 = vector.multi_reduction <maximumf>, %63, %cst_21 [1] : vector<5x5xf32> to vector<5xf32>
    %65 = vector.shape_cast %64 : vector<5xf32> to vector<5x1xf32>
    %66 = vector.broadcast %65 : vector<5x1xf32> to vector<5x5xf32>
    %67 = arith.subf %63, %66 : vector<5x5xf32>
    %68 = math.exp %67 : vector<5x5xf32>
    %cst_22 = arith.constant dense<0.000000e+00> : vector<5xf32>
    %69 = vector.multi_reduction <add>, %68, %cst_22 [1] : vector<5x5xf32> to vector<5xf32>
    %70 = vector.shape_cast %69 : vector<5xf32> to vector<5x1xf32>
    %71 = tpu.reciprocal %70 {approx = true} : vector<5x1xf32> -> vector<5x1xf32>
    %72 = vector.broadcast %71 : vector<5x1xf32> to vector<5x5xf32>
    %73 = arith.mulf %68, %72 : vector<5x5xf32>
    %74 = arith.truncf %73 : vector<5x5xf32> to vector<5x5xbf16>
    %cst_23 = arith.constant dense<0.000000e+00> : vector<5x16xf32>
    %75 = tpu.matmul %74, %62, %cst_23 {dimension_numbers = #tpu.dot_dimension_numbers<[1], [0], [0], [1], [0, 0, 1, 1], [], []>} : vector<5x5xbf16>, vector<5x16xbf16>, vector<5x16xf32> -> vector<5x16xf32>
    %76 = vector.extract_strided_slice %35 {offsets = [0, 32], sizes = [5, 16], strides = [1, 1]} : vector<5x64xf32> to vector<5x16xf32>
    %77 = arith.truncf %76 : vector<5x16xf32> to vector<5x16xbf16>
    %78 = vector.extract_strided_slice %36 {offsets = [0, 32], sizes = [5, 16], strides = [1, 1]} : vector<5x64xf32> to vector<5x16xf32>
    %79 = arith.truncf %78 : vector<5x16xf32> to vector<5x16xbf16>
    %80 = vector.extract_strided_slice %37 {offsets = [0, 32], sizes = [5, 16], strides = [1, 1]} : vector<5x64xf32> to vector<5x16xf32>
    %81 = arith.truncf %80 : vector<5x16xf32> to vector<5x16xbf16>
    %cst_24 = arith.constant dense<0.000000e+00> : vector<5x5xf32>
    %82 = tpu.matmul %77, %79, %cst_24 {dimension_numbers = #tpu.dot_dimension_numbers<[1], [1], [0], [0], [0, 0, 1, 0], [], []>} : vector<5x16xbf16>, vector<5x16xbf16>, vector<5x5xf32> -> vector<5x5xf32>
    %cst_25 = arith.constant dense<0xFF800000> : vector<5xf32>
    %83 = vector.multi_reduction <maximumf>, %82, %cst_25 [1] : vector<5x5xf32> to vector<5xf32>
    %84 = vector.shape_cast %83 : vector<5xf32> to vector<5x1xf32>
    %85 = vector.broadcast %84 : vector<5x1xf32> to vector<5x5xf32>
    %86 = arith.subf %82, %85 : vector<5x5xf32>
    %87 = math.exp %86 : vector<5x5xf32>
    %cst_26 = arith.constant dense<0.000000e+00> : vector<5xf32>
    %88 = vector.multi_reduction <add>, %87, %cst_26 [1] : vector<5x5xf32> to vector<5xf32>
    %89 = vector.shape_cast %88 : vector<5xf32> to vector<5x1xf32>
    %90 = tpu.reciprocal %89 {approx = true} : vector<5x1xf32> -> vector<5x1xf32>
    %91 = vector.broadcast %90 : vector<5x1xf32> to vector<5x5xf32>
    %92 = arith.mulf %87, %91 : vector<5x5xf32>
    %93 = arith.truncf %92 : vector<5x5xf32> to vector<5x5xbf16>
    %cst_27 = arith.constant dense<0.000000e+00> : vector<5x16xf32>
    %94 = tpu.matmul %93, %81, %cst_27 {dimension_numbers = #tpu.dot_dimension_numbers<[1], [0], [0], [1], [0, 0, 1, 1], [], []>} : vector<5x5xbf16>, vector<5x16xbf16>, vector<5x16xf32> -> vector<5x16xf32>
    %95 = vector.extract_strided_slice %35 {offsets = [0, 48], sizes = [5, 16], strides = [1, 1]} : vector<5x64xf32> to vector<5x16xf32>
    %96 = arith.truncf %95 : vector<5x16xf32> to vector<5x16xbf16>
    %97 = vector.extract_strided_slice %36 {offsets = [0, 48], sizes = [5, 16], strides = [1, 1]} : vector<5x64xf32> to vector<5x16xf32>
    %98 = arith.truncf %97 : vector<5x16xf32> to vector<5x16xbf16>
    %99 = vector.extract_strided_slice %37 {offsets = [0, 48], sizes = [5, 16], strides = [1, 1]} : vector<5x64xf32> to vector<5x16xf32>
    %100 = arith.truncf %99 : vector<5x16xf32> to vector<5x16xbf16>
    %cst_28 = arith.constant dense<0.000000e+00> : vector<5x5xf32>
    %101 = tpu.matmul %96, %98, %cst_28 {dimension_numbers = #tpu.dot_dimension_numbers<[1], [1], [0], [0], [0, 0, 1, 0], [], []>} : vector<5x16xbf16>, vector<5x16xbf16>, vector<5x5xf32> -> vector<5x5xf32>
    %cst_29 = arith.constant dense<0xFF800000> : vector<5xf32>
    %102 = vector.multi_reduction <maximumf>, %101, %cst_29 [1] : vector<5x5xf32> to vector<5xf32>
    %103 = vector.shape_cast %102 : vector<5xf32> to vector<5x1xf32>
    %104 = vector.broadcast %103 : vector<5x1xf32> to vector<5x5xf32>
    %105 = arith.subf %101, %104 : vector<5x5xf32>
    %106 = math.exp %105 : vector<5x5xf32>
    %cst_30 = arith.constant dense<0.000000e+00> : vector<5xf32>
    %107 = vector.multi_reduction <add>, %106, %cst_30 [1] : vector<5x5xf32> to vector<5xf32>
    %108 = vector.shape_cast %107 : vector<5xf32> to vector<5x1xf32>
    %109 = tpu.reciprocal %108 {approx = true} : vector<5x1xf32> -> vector<5x1xf32>
    %110 = vector.broadcast %109 : vector<5x1xf32> to vector<5x5xf32>
    %111 = arith.mulf %106, %110 : vector<5x5xf32>
    %112 = arith.truncf %111 : vector<5x5xf32> to vector<5x5xbf16>
    %cst_31 = arith.constant dense<0.000000e+00> : vector<5x16xf32>
    %113 = tpu.matmul %112, %100, %cst_31 {dimension_numbers = #tpu.dot_dimension_numbers<[1], [0], [0], [1], [0, 0, 1, 1], [], []>} : vector<5x5xbf16>, vector<5x16xbf16>, vector<5x16xf32> -> vector<5x16xf32>
    %114 = tpu.concatenate %56, %75, %94, %113 in 1 : vector<5x16xf32>, vector<5x16xf32>, vector<5x16xf32>, vector<5x16xf32> -> vector<5x64xf32>
    %115 = arith.truncf %114 : vector<5x64xf32> to vector<5x64xbf16>
    %c0_32 = arith.constant 0 : index
    %c0_33 = arith.constant 0 : index
    %116 = vector.load %arg6[%c0_32, %c0_33] : memref<64x64xbf16, #tpu.memory_space<vmem>>, vector<64x64xbf16>
    %cst_34 = arith.constant dense<0.000000e+00> : vector<5x64xf32>
    %117 = tpu.matmul %115, %116, %cst_34 {dimension_numbers = #tpu.dot_dimension_numbers<[1], [0], [0], [1], [0, 0, 1, 1], [], []>} : vector<5x64xbf16>, vector<64x64xbf16>, vector<5x64xf32> -> vector<5x64xf32>
    %c0_35 = arith.constant 0 : index
    %c0_36 = arith.constant 0 : index
    %118 = vector.load %arg7[%c0_35, %c0_36] : memref<1x64xf32, #tpu.memory_space<vmem>>, vector<1x64xf32>
    %119 = vector.broadcast %118 : vector<1x64xf32> to vector<5x64xf32>
    %120 = arith.addf %117, %119 : vector<5x64xf32>
    %121 = arith.addf %120, %2 : vector<5x64xf32>
    %122 = arith.truncf %121 : vector<5x64xf32> to vector<5x64xbf16>
    %c0_37 = arith.constant 0 : index
    %c0_38 = arith.constant 0 : index
    %c0_39 = arith.constant 0 : index
    %123 = vector.load %arg8[%c0_37, %c0_38, %c0_39] : memref<1x5x64xbf16, #tpu.memory_space<vmem>>, vector<1x5x64xbf16>
    %124 = vector.shape_cast %123 : vector<1x5x64xbf16> to vector<5x64xbf16>
    %125 = vector.shape_cast %122 : vector<5x64xbf16> to vector<1x5x64xbf16>
    tpu.vector_store %arg8[%c0_37, %c0_38, %c0_39], %125 {strides = array<i32>} : memref<1x5x64xbf16, #tpu.memory_space<vmem>>, vector<1x5x64xbf16>,
    return
  }
  func.func @transform_0(%arg0: i32) -> (i32, i32, i32) {
    %c0_i32 = arith.constant 0 : i32
    %c0_i32_0 = arith.constant 0 : i32
    %c0_i32_1 = arith.constant 0 : i32
    return %arg0, %c0_i32, %c0_i32_0 : i32, i32, i32
  }
  func.func @transform_1(%arg0: i32) -> (i32, i32) {
    %c0_i32 = arith.constant 0 : i32
    %c0_i32_0 = arith.constant 0 : i32
    %c0_i32_1 = arith.constant 0 : i32
    return %c0_i32, %c0_i32_0 : i32, i32
  }
  func.func @transform_2(%arg0: i32) -> (i32, i32) {
    %c0_i32 = arith.constant 0 : i32
    %c0_i32_0 = arith.constant 0 : i32
    %c0_i32_1 = arith.constant 0 : i32
    return %c0_i32, %c0_i32_0 : i32, i32
  }
  func.func @transform_3(%arg0: i32) -> (i32, i32) {
    %c0_i32 = arith.constant 0 : i32
    %c0_i32_0 = arith.constant 0 : i32
    %c0_i32_1 = arith.constant 0 : i32
    return %c0_i32, %c0_i32_0 : i32, i32
  }
  func.func @transform_4(%arg0: i32) -> (i32, i32) {
    %c0_i32 = arith.constant 0 : i32
    %c0_i32_0 = arith.constant 0 : i32
    %c0_i32_1 = arith.constant 0 : i32
    return %c0_i32, %c0_i32_0 : i32, i32
  }
  func.func @transform_5(%arg0: i32) -> (i32, i32) {
    %c0_i32 = arith.constant 0 : i32
    %c0_i32_0 = arith.constant 0 : i32
    %c0_i32_1 = arith.constant 0 : i32
    return %c0_i32, %c0_i32_0 : i32, i32
  }
  func.func @transform_6(%arg0: i32) -> (i32, i32) {
    %c0_i32 = arith.constant 0 : i32
    %c0_i32_0 = arith.constant 0 : i32
    %c0_i32_1 = arith.constant 0 : i32
    return %c0_i32, %c0_i32_0 : i32, i32
  }
  func.func @transform_7(%arg0: i32) -> (i32, i32, i32) {
    %c0_i32 = arith.constant 0 : i32
    %c0_i32_0 = arith.constant 0 : i32
    %c0_i32_1 = arith.constant 0 : i32
    return %arg0, %c0_i32, %c0_i32_0 : i32, i32, i32
  }
}

</mosaic_0001>

<llo_original>
// kernel: run.3
$region0: #{run.3}
  #allocation0 [shape = 'u32[]', space=smem, size = 0x4, offset = 0x4, fixed_abs, tag = 'smem constant byte address 0x4 - core index']
  #allocation1 [shape = 'u32[144,128]{1,0:T(1,128)}', space=vmem, size = 0x12000, scoped, tag = 'internal scratch']
  %s0 = inlined_call_operand.vmem [shape: bf16[28,5,192], index: 0, kind: input, shape index: {}]
  %s1 = inlined_call_operand.vmem [shape: bf16[192,64], index: 1, kind: input, shape index: {}]
  %s2 = inlined_call_operand.vmem [shape: f32[5,64], index: 2, kind: input, shape index: {}]
  %s3 = inlined_call_operand.vmem [shape: f32[1,64], index: 3, kind: input, shape index: {}]
  %s4 = inlined_call_operand.vmem [shape: f32[1,64], index: 4, kind: input, shape index: {}]
  %s5 = inlined_call_operand.vmem [shape: bf16[28,5,64], index: 5, kind: output, shape index: {}]
  %s6 = sld [smem:[#allocation0]]
  $region53: #{run.3} parent=0
    _
  %s8 = ssub.s32 1, %s6
  %s9 = scalar_select 0, %s8, %s6
  loop: start=0, step=1, limit=30
  $region2: #{run.3} parent=0 // loop_pre_header
    _
  $region3: #{run.3} parent=0 // loop_header
    %s11 = sphi 0, %s15
    %p12 = scmp.ge.s32.totalorder %s11, 30
    %s21 = sphi 0, %s23
    %s24 = sphi 0, %s21
    %s25 = sphi 0, %s24
    %s41 = sphi 0, %s25
    %s45 = sphi 0, %s45
    %s47 = sphi 0, %s45
    %s48 = sphi 0, %s47
    %s62 = sphi 0, %s48
    %s66 = sphi 0, %s66
    %s68 = sphi 0, %s66
    %s69 = sphi 0, %s68
    %s83 = sphi 0, %s69
    %s87 = sphi 0, %s87
    %s89 = sphi 0, %s87
    %s90 = sphi 0, %s89
    %s104 = sphi 0, %s90
    %s108 = sphi 0, %s108
    %s110 = sphi 0, %s108
    %s111 = sphi 0, %s110
    %s125 = sphi 0, %s111
    %s131 = sphi 0, %s133
    %s134 = sphi 0, %s131
    %s135 = sphi 0, %s134
    %s151 = sphi 0, %s135
  $region4: #{run.3} parent=0 // loop_header_branch
    %14 = sbr.rel (%p12) target = $region8
  $region5: #{run.3} parent=0 // loop_body
    %s16 = ssub.s32 %s11, 1
    %s17 = ssub.s32 %s11, 2
    %s18 = sadd.s32 %s11, 1
    %s19 = ssub.s32 %s11, %s18
    %p20 = scmp.eq.s32.totalorder %s19, 0
    %s22 = sadd.s32 %s21, 1
    %s23 = scalar_select %p20, %s21, %s22
    %p26 = pneg %p20
    %p27 = scmp.eq.s32.totalorder %s11, 27
    %p28 = por %p26, %p27
    %p29 = scmp.ne.s32.totalorder %s21, %s24
    %p30 = scmp.eq.s32.totalorder %s11, 0
    %p31 = por %p29, %p30
    %p32 = scmp.ne.s32.totalorder %s21, %s24
    %p33 = scmp.eq.s32.totalorder %s16, 27
    %p34 = por %p32, %p33
    %p35 = scmp.ne.s32.totalorder %s24, %s25
    %p36 = scmp.eq.s32.totalorder %s16, 0
    %p37 = por %p35, %p36
    %p38 = scmp.ne.s32.totalorder %s24, %s25
    %p39 = scmp.eq.s32.totalorder %s17, 27
    %p40 = por %p38, %p39
    %p42 = scmp.ne.s32.totalorder %s25, %s41
    %p43 = scmp.eq.s32.totalorder %s17, 0
    %p44 = por %p42, %p43
    %s46 = sadd.s32 %s45, 1
    %p49 = scmp.eq.s32.totalorder %s11, 27
    %p50 = scmp.ne.s32.totalorder %s45, %s47
    %p51 = scmp.eq.s32.totalorder %s11, 0
    %p52 = por %p50, %p51
    %p53 = scmp.ne.s32.totalorder %s45, %s47
    %p54 = scmp.eq.s32.totalorder %s16, 27
    %p55 = por %p53, %p54
    %p56 = scmp.ne.s32.totalorder %s47, %s48
    %p57 = scmp.eq.s32.totalorder %s16, 0
    %p58 = por %p56, %p57
    %p59 = scmp.ne.s32.totalorder %s47, %s48
    %p60 = scmp.eq.s32.totalorder %s17, 27
    %p61 = por %p59, %p60
    %p63 = scmp.ne.s32.totalorder %s48, %s62
    %p64 = scmp.eq.s32.totalorder %s17, 0
    %p65 = por %p63, %p64
    %s67 = sadd.s32 %s66, 1
    %p70 = scmp.eq.s32.totalorder %s11, 27
    %p71 = scmp.ne.s32.totalorder %s66, %s68
    %p72 = scmp.eq.s32.totalorder %s11, 0
    %p73 = por %p71, %p72
    %p74 = scmp.ne.s32.totalorder %s66, %s68
    %p75 = scmp.eq.s32.totalorder %s16, 27
    %p76 = por %p74, %p75
    %p77 = scmp.ne.s32.totalorder %s68, %s69
    %p78 = scmp.eq.s32.totalorder %s16, 0
    %p79 = por %p77, %p78
    %p80 = scmp.ne.s32.totalorder %s68, %s69
    %p81 = scmp.eq.s32.totalorder %s17, 27
    %p82 = por %p80, %p81
    %p84 = scmp.ne.s32.totalorder %s69, %s83
    %p85 = scmp.eq.s32.totalorder %s17, 0
    %p86 = por %p84, %p85
    %s88 = sadd.s32 %s87, 1
    %p91 = scmp.eq.s32.totalorder %s11, 27
    %p92 = scmp.ne.s32.totalorder %s87, %s89
    %p93 = scmp.eq.s32.totalorder %s11, 0
    %p94 = por %p92, %p93
    %p95 = scmp.ne.s32.totalorder %s87, %s89
    %p96 = scmp.eq.s32.totalorder %s16, 27
    %p97 = por %p95, %p96
    %p98 = scmp.ne.s32.totalorder %s89, %s90
    %p99 = scmp.eq.s32.totalorder %s16, 0
    %p100 = por %p98, %p99
    %p101 = scmp.ne.s32.totalorder %s89, %s90
    %p102 = scmp.eq.s32.totalorder %s17, 27
    %p103 = por %p101, %p102
    %p105 = scmp.ne.s32.totalorder %s90, %s104
    %p106 = scmp.eq.s32.totalorder %s17, 0
    %p107 = por %p105, %p106
    %s109 = sadd.s32 %s108, 1
    %p112 = scmp.eq.s32.totalorder %s11, 27
    %p113 = scmp.ne.s32.totalorder %s108, %s110
    %p114 = scmp.eq.s32.totalorder %s11, 0
    %p115 = por %p113, %p114
    %p116 = scmp.ne.s32.totalorder %s108, %s110
    %p117 = scmp.eq.s32.totalorder %s16, 27
    %p118 = por %p116, %p117
    %p119 = scmp.ne.s32.totalorder %s110, %s111
    %p120 = scmp.eq.s32.totalorder %s16, 0
    %p121 = por %p119, %p120
    %p122 = scmp.ne.s32.totalorder %s110, %s111
    %p123 = scmp.eq.s32.totalorder %s17, 27
    %p124 = por %p122, %p123
    %p126 = scmp.ne.s32.totalorder %s111, %s125
    %p127 = scmp.eq.s32.totalorder %s17, 0
    %p128 = por %p126, %p127
    %s129 = ssub.s32 %s11, %s18
    %p130 = scmp.eq.s32.totalorder %s129, 0
    %s132 = sadd.s32 %s131, 1
    %s133 = scalar_select %p130, %s131, %s132
    %p136 = pneg %p130
    %p137 = scmp.eq.s32.totalorder %s11, 27
    %p138 = por %p136, %p137
    %p139 = scmp.ne.s32.totalorder %s131, %s134
    %p140 = scmp.eq.s32.totalorder %s11, 0
    %p141 = por %p139, %p140
    %p142 = scmp.ne.s32.totalorder %s131, %s134
    %p143 = scmp.eq.s32.totalorder %s16, 27
    %p144 = por %p142, %p143
    %p145 = scmp.ne.s32.totalorder %s134, %s135
    %p146 = scmp.eq.s32.totalorder %s16, 0
    %p147 = por %p145, %p146
    %p148 = scmp.ne.s32.totalorder %s134, %s135
    %p149 = scmp.eq.s32.totalorder %s17, 27
    %p150 = por %p148, %p149
    %p152 = scmp.ne.s32.totalorder %s135, %s151
    %p153 = scmp.eq.s32.totalorder %s17, 0
    %p154 = por %p152, %p153
    %p155 = scmp.le.s32.totalorder 1, %s11
    %p156 = scmp.lt.s32.totalorder %s11, 29
    %p157 = pnand %p155, %p156
    %p158 = pneg %p157
    // Predicated region
    $region9: #{run.3} parent=5 // pred_check
      _
    $region10: #{run.3} parent=5 // pred_check_branch
      %160 = sbr.rel (%p157) target = $region12
    $region11: #{run.3} parent=5 // pred_region
      %s161 = ssub.s32 %s11, 1
      // Predicated region
      $region13: #{run.3} parent=11 // pred_check
        %p162 = pneg %p58
      $region14: #{run.3} parent=11 // pred_check_branch
        %164 = sbr.rel (%p162) target = $region16
      $region15: #{run.3} parent=11 // pred_region
        _
      $region16: #{run.3} parent=11 // pred_fallthru
        _
      // Predicated region
      $region17: #{run.3} parent=11 // pred_check
        %p165 = pneg %p79
      $region18: #{run.3} parent=11 // pred_check_branch
        %167 = sbr.rel (%p165) target = $region20
      $region19: #{run.3} parent=11 // pred_region
        _
      $region20: #{run.3} parent=11 // pred_fallthru
        _
      // Predicated region
      $region21: #{run.3} parent=11 // pred_check
        %p168 = pneg %p100
      $region22: #{run.3} parent=11 // pred_check_branch
        %170 = sbr.rel (%p168) target = $region24
      $region23: #{run.3} parent=11 // pred_region
        _
      $region24: #{run.3} parent=11 // pred_fallthru
        _
      // Predicated region
      $region25: #{run.3} parent=11 // pred_check
        %p171 = pneg %p121
      $region26: #{run.3} parent=11 // pred_check_branch
        %173 = sbr.rel (%p171) target = $region28
      $region27: #{run.3} parent=11 // pred_region
        _
      $region28: #{run.3} parent=11 // pred_fallthru
        _
    $region12: #{run.3} parent=5 // pred_fallthru
      _
    %p174 = scmp.lt.s32.totalorder %s11, 28
    // Predicated region
    $region29: #{run.3} parent=5 // pred_check
      %p175 = pneg %p174
    $region30: #{run.3} parent=5 // pred_check_branch
      %177 = sbr.rel (%p175) target = $region32
    $region31: #{run.3} parent=5 // pred_region
      // Predicated region
      $region33: #{run.3} parent=31 // pred_check
        %p178 = pneg %p31
      $region34: #{run.3} parent=31 // pred_check_branch
        %180 = sbr.rel (%p178) target = $region36
      $region35: #{run.3} parent=31 // pred_region
        %p181 = scmp.lt.s32.totalorder %s11, 27
        %s182 = scalar_select %p181, %s11, 27
        %s183 = smul.addr %s182, 2
        %s184 = smul.addr %s183, 4
        %s185 = scalar_lea.vmem %s0, %s184
      $region36: #{run.3} parent=31 // pred_fallthru
        _
    $region32: #{run.3} parent=5 // pred_fallthru
      _
    %p186 = scmp.le.s32.totalorder 1, %s11
    %p187 = scmp.lt.s32.totalorder %s11, 29
    %p188 = pnand %p186, %p187
    %p189 = pneg %p188
    // Predicated region
    $region37: #{run.3} parent=5 // pred_check
      _
    $region38: #{run.3} parent=5 // pred_check_branch
      %191 = sbr.rel (%p188) target = $region40
    $region39: #{run.3} parent=5 // pred_region
      %s192 = ssub.s32 %s11, 1
      %p193 = scmp.lt.s32.totalorder %s16, 27
      %s194 = scalar_select %p193, %s16, 27
      %s195 = smul.addr %s194, 2
      %s196 = smul.addr %s195, 4
      %s197 = scalar_lea.vmem %s0, %s196
      %p198 = pneg %p37
      %p199 = pneg %p34
      %p200 = pneg %p58
      %p201 = pneg %p55
      %p202 = pneg %p79
      %p203 = pneg %p76
      %p204 = pneg %p100
      %p205 = pneg %p97
      %p206 = pneg %p121
      %p207 = pneg %p118
      %p208 = pneg %p147
      %p209 = pneg %p144
      %p210 = scmp.lt.s32.totalorder %s16, 27
      %s211 = scalar_select %p210, %s16, 27
      %s212 = smul.addr %s211, 4
      %s213 = scalar_lea.vmem %s5, %s212
      %p214 = scmp.lt.s32.totalorder %s16, 27
      %s215 = scalar_select %p214, %s16, 27
      %s216 = smul.addr %s215, 2
      %s217 = smul.addr %s216, 4
      %s218 = scalar_lea.vmem %s0, %s217
      %p219 = scmp.lt.s32.totalorder %s16, 27
      %s220 = scalar_select %p219, %s16, 27
      %s221 = smul.addr %s220, 4
      %s222 = scalar_lea.vmem %s5, %s221
      %v224 = vld [vmem:[%s218] sm:$0x77]
      %v225 = vld [vmem:[%s1] sm:$0xf]
      %v226 = vld [vmem:[%s1 + $0x4] sm:$0xf]
      %v227 = vld [vmem:[%s1 + $0x8] sm:$0xf]
      %v228 = vld [vmem:[%s1 + $0xc] sm:$0xf]
      %v229 = vld [vmem:[%s1 + $0x10] sm:$0xf]
      %v230 = vld [vmem:[%s1 + $0x14] sm:$0xf]
      %v231 = vld [vmem:[%s1 + $0x18] sm:$0xf]
      %v232 = vld [vmem:[%s1 + $0x1c] sm:$0xf]
      %v233 = vld [vmem:[%s1 + $0x20] sm:$0xf]
      %v234 = vld [vmem:[%s1 + $0x24] sm:$0xf]
      %v235 = vld [vmem:[%s1 + $0x28] sm:$0xf]
      %v236 = vld [vmem:[%s1 + $0x2c] sm:$0xf]
      %v237 = vld [vmem:[%s1 + $0x30] sm:$0xf]
      %v238 = vld [vmem:[%s1 + $0x34] sm:$0xf]
      %v239 = vld [vmem:[%s1 + $0x38] sm:$0xf]
      %v240 = vld [vmem:[%s1 + $0x3c] sm:$0xf]
      %v241 = vld [vmem:[%s1 + $0x40] sm:$0xf]
      %v242 = vld [vmem:[%s1 + $0x44] sm:$0xf]
      %v243 = vld [vmem:[%s1 + $0x48] sm:$0xf]
      %v244 = vld [vmem:[%s1 + $0x4c] sm:$0xf]
      %v245 = vld [vmem:[%s1 + $0x50] sm:$0xf]
      %v246 = vld [vmem:[%s1 + $0x54] sm:$0xf]
      %v247 = vld [vmem:[%s1 + $0x58] sm:$0xf]
      %v248 = vld [vmem:[%s1 + $0x5c] sm:$0xf]
      %v249 = vld [vmem:[%s2] sm:$0x1f]
      %v251 = vunpack.c.l.b16 %v224
      %v252 = vunpack.c.h.b16 %v224
      %v253 = vpack.c.b16 %v251, %v251
      %v254 = vpack.c.b16 %v252, %v252
      %v280 = vunpack.c.l.b16 %v225
      %v281 = vunpack.c.l.b16 %v226
      %v282 = vunpack.c.l.b16 %v227
      %v283 = vunpack.c.l.b16 %v228
      %v284 = vunpack.c.l.b16 %v229
      %v285 = vunpack.c.l.b16 %v230
      %v286 = vunpack.c.l.b16 %v231
      %v287 = vunpack.c.l.b16 %v232
      %v288 = vunpack.c.l.b16 %v233
      %v289 = vunpack.c.l.b16 %v234
      %v290 = vunpack.c.l.b16 %v235
      %v291 = vunpack.c.l.b16 %v236
      %v292 = vunpack.c.l.b16 %v237
      %v293 = vunpack.c.l.b16 %v238
      %v294 = vunpack.c.l.b16 %v239
      %v295 = vunpack.c.l.b16 %v240
      %v296 = vunpack.c.l.b16 %v241
      %v297 = vunpack.c.l.b16 %v242
      %v298 = vunpack.c.l.b16 %v243
      %v299 = vunpack.c.l.b16 %v244
      %v300 = vunpack.c.l.b16 %v245
      %v301 = vunpack.c.l.b16 %v246
      %v302 = vunpack.c.l.b16 %v247
      %v303 = vunpack.c.l.b16 %v248
      %v304 = vpack.c.b16 %v281, %v280
      %v305 = vpack.c.b16 %v283, %v282
      %v306 = vpack.c.b16 %v285, %v284
      %v307 = vpack.c.b16 %v287, %v286
      %v308 = vpack.c.b16 %v289, %v288
      %v309 = vpack.c.b16 %v291, %v290
      %v310 = vpack.c.b16 %v293, %v292
      %v311 = vpack.c.b16 %v295, %v294
      %v312 = vpack.c.b16 %v297, %v296
      %v313 = vpack.c.b16 %v299, %v298
      %v314 = vpack.c.b16 %v301, %v300
      %v315 = vpack.c.b16 %v303, %v302
      %vm328 = vcmask 523264
      %v330 = vsel %vm328, %v254, 0
      %332 = vmatprep.subr.bf16.mxu0 0
      %333 = vmatpush1.bf16.msra.mxu0 %v304
      %334 = vmatprep.subr.bf16.mxu0 0
      %335 = vmatpush1.bf16.msra.mxu0 %v305
      %336 = vmatprep.subr.bf16.mxu0 0
      %337 = vmatpush1.bf16.msra.mxu0 %v306
      %338 = vmatprep.subr.bf16.mxu0 0
      %339 = vmatpush1.bf16.msra.mxu0 %v307
      %340 = vmatprep.subr.bf16.mxu0 0
      %341 = vmatpush1.bf16.msra.mxu0 %v308
      %342 = vmatprep.subr.bf16.mxu0 0
      %343 = vmatpush1.bf16.msra.mxu0 %v309
      %344 = vmatprep.subr.bf16.mxu0 0
      %345 = vmatpush1.bf16.msra.mxu0 %v310
      %346 = vmatprep.subr.bf16.mxu0 0
      %347 = vmatpush1.bf16.msra.mxu0 %v311
      %348 = vmatprep.subr.bf16.mxu0 0
      %349 = vmatpush1.bf16.msra.mxu0 %v312
      %350 = vmatprep.subr.bf16.mxu0 0
      %351 = vmatpush1.bf16.msra.mxu0 %v313
      %352 = vmatprep.subr.bf16.mxu0 0
      %353 = vmatpush1.bf16.msra.mxu0 %v314
      %354 = vmatprep.subr.bf16.mxu0 0
      %355 = vmatpush1.bf16.msra.mxu0 %v315
      %356 = vmatprep.subr.bf16.mxu0 0
      %357 = vmatpush1.bf16.msra.mxu0 0
      %358 = vmatprep.subr.bf16.mxu0 0
      %359 = vmatpush1.bf16.msra.mxu0 0
      %360 = vmatprep.subr.bf16.mxu0 0
      %361 = vmatpush1.bf16.msra.mxu0 0
      %362 = vmatprep.subr.bf16.mxu0 0
      %363 = vmatpush1.bf16.msra.mxu0 0
      %364 = vmatprep.mubr.bf16.mxu0 %v330
      %365 = vmatmul.mubr.bf16.gmra.mrb[0].mxu0 %v253
      %v366 = vpop.f32.mrb[0].mxu0
      %v367 = vadd.f32 %v249, %v366
      %v368 = vpop.f32.mrb[0].mxu0
      %v369 = vpop.f32.mrb[0].mxu0
      %v370 = vpop.f32.mrb[0].mxu0
      %371 = vdwg.mxu0
      %v372 = vld [vmem:[%s3] sm:$0x1]
      %v373 = vld [vmem:[%s4] sm:$0x1]
      %vm374 = vcmask 520192
      %v375 = vsel %vm374, %v367, 0.0
      %376 = vadd.xlane.f32.xlu0 %v375
      %v377 = vpop.xlane.xlu0 %376
      %v378 = vrcp.pop 64.0
      %v379 = vmul.f32 %v377, %v378
      %v380 = vsub.f32 %v367, %v379
      %v381 = vmul.f32 %v380, %v380
      %v382 = vsel %vm374, %v381, 0.0
      %383 = vadd.xlane.f32.xlu0 %v382
      %v384 = vpop.xlane.xlu0 %383
      %v385 = vmul.f32 %v384, %v378
      %v386 = vadd.f32 %v385, 1e-05
      %v387 = vrsqrt.pop %v386
      %v388 = vmul.f32 %v380, %v387
      %v390 = vlaneseq
      %v391 = vshrl.u32 %v390, 7
      %v392 = vsub.s32 0, %v391
      %v393 = vrot.slane %v372, %v392
      %v395 = vmul.f32 %v388, %v393
      %v397 = vlaneseq
      %v398 = vshrl.u32 %v397, 7
      %v399 = vsub.s32 0, %v398
      %v400 = vrot.slane %v373, %v399
      %v402 = vadd.f32 %v395, %v400
      %v403 = vpack.c.bf16 %v402, %v402
      %vm404 = vcmask 518144
      %vm405 = vsmask.f32 2304
      %vm406 = vmand %vm404, %vm405
      %v407 = vld [vmem:[%s222] sm:$0x7]
      %v408 = vsel %vm406, %v403, %v407
      %409 = vst [vmem:[%s222] sm:$0x7] %v408
      %p410 = scmp.lt.s32.totalorder %s16, 27
      %s411 = scalar_select %p410, %s16, 27
      %s412 = smul.addr %s411, 4
      %s413 = scalar_lea.vmem %s5, %s412
      // Predicated region
      $region41: #{run.3} parent=39 // pred_check
        %p414 = pneg %p144
      $region42: #{run.3} parent=39 // pred_check_branch
        %416 = sbr.rel (%p414) target = $region44
      $region43: #{run.3} parent=39 // pred_region
        _
      $region44: #{run.3} parent=39 // pred_fallthru
        _
    $region40: #{run.3} parent=5 // pred_fallthru
      _
    %p417 = scmp.le.s32.totalorder 2, %s11
    // Predicated region
    $region45: #{run.3} parent=5 // pred_check
      %p418 = pneg %p417
    $region46: #{run.3} parent=5 // pred_check_branch
      %420 = sbr.rel (%p418) target = $region48
    $region47: #{run.3} parent=5 // pred_region
      %s421 = ssub.s32 %s11, 2
      // Predicated region
      $region49: #{run.3} parent=47 // pred_check
        %p422 = pneg %p150
      $region50: #{run.3} parent=47 // pred_check_branch
        %424 = sbr.rel (%p422) target = $region52
      $region51: #{run.3} parent=47 // pred_region
        %p425 = scmp.lt.s32.totalorder %s17, 27
        %s426 = scalar_select %p425, %s17, 27
        %s427 = smul.addr %s426, 4
        %s428 = scalar_lea.vmem %s5, %s427
      $region52: #{run.3} parent=47 // pred_fallthru
        _
    $region48: #{run.3} parent=5 // pred_fallthru
      _
  $region6: #{run.3} parent=0 // loop_footer
    %s15 = sadd.s32 1, %s11
  $region7: #{run.3} parent=0 // loop_footer_branch
    %10 = sbr.rel target = $region3
  $region8: #{run.3} parent=0 // loop_exit
    _

// kernel: run.5
$region0: #{run.5}
  #allocation0 [shape = 'u32[]', space=smem, size = 0x4, offset = 0x4, fixed_abs, tag = 'smem constant byte address 0x4 - core index']
  #allocation1 [shape = 'u32[144,128]{1,0:T(1,128)}', space=vmem, size = 0x12000, scoped, tag = 'internal scratch']
  %s0 = inlined_call_operand.vmem [shape: bf16[28,5,64], index: 0, kind: input, shape index: {}]
  %s1 = inlined_call_operand.vmem [shape: f32[1,64], index: 1, kind: input, shape index: {}]
  %s2 = inlined_call_operand.vmem [shape: f32[1,64], index: 2, kind: input, shape index: {}, may-alias: {2,6}]
  %s3 = inlined_call_operand.vmem [shape: bf16[64,256], index: 3, kind: input, shape index: {}]
  %s4 = inlined_call_operand.vmem [shape: f32[1,256], index: 4, kind: input, shape index: {}]
  %s5 = inlined_call_operand.vmem [shape: bf16[256,64], index: 5, kind: input, shape index: {}]
  %s6 = inlined_call_operand.vmem [shape: f32[1,64], index: 6, kind: input, shape index: {}, may-alias: {2,6}]
  %s7 = inlined_call_operand.vmem [shape: bf16[28,5,64], index: 7, kind: output, shape index: {}]
  %s8 = sld [smem:[#allocation0]]
  $region61: #{run.5} parent=0
    _
  %s10 = ssub.s32 1, %s8
  %s11 = scalar_select 0, %s10, %s8
  loop: start=0, step=1, limit=30
  $region2: #{run.5} parent=0 // loop_pre_header
    _
  $region3: #{run.5} parent=0 // loop_header
    %s13 = sphi 0, %s17
    %p14 = scmp.ge.s32.totalorder %s13, 30
    %s23 = sphi 0, %s25
    %s26 = sphi 0, %s23
    %s27 = sphi 0, %s26
    %s43 = sphi 0, %s27
    %s47 = sphi 0, %s47
    %s49 = sphi 0, %s47
    %s50 = sphi 0, %s49
    %s64 = sphi 0, %s50
    %s68 = sphi 0, %s68
    %s70 = sphi 0, %s68
    %s71 = sphi 0, %s70
    %s85 = sphi 0, %s71
    %s89 = sphi 0, %s89
    %s91 = sphi 0, %s89
    %s92 = sphi 0, %s91
    %s106 = sphi 0, %s92
    %s110 = sphi 0, %s110
    %s112 = sphi 0, %s110
    %s113 = sphi 0, %s112
    %s127 = sphi 0, %s113
    %s131 = sphi 0, %s131
    %s133 = sphi 0, %s131
    %s134 = sphi 0, %s133
    %s148 = sphi 0, %s134
    %s152 = sphi 0, %s152
    %s154 = sphi 0, %s152
    %s155 = sphi 0, %s154
    %s169 = sphi 0, %s155
    %s175 = sphi 0, %s177
    %s178 = sphi 0, %s175
    %s179 = sphi 0, %s178
    %s195 = sphi 0, %s179
  $region4: #{run.5} parent=0 // loop_header_branch
    %16 = sbr.rel (%p14) target = $region8
  $region5: #{run.5} parent=0 // loop_body
    %s18 = ssub.s32 %s13, 1
    %s19 = ssub.s32 %s13, 2
    %s20 = sadd.s32 %s13, 1
    %s21 = ssub.s32 %s13, %s20
    %p22 = scmp.eq.s32.totalorder %s21, 0
    %s24 = sadd.s32 %s23, 1
    %s25 = scalar_select %p22, %s23, %s24
    %p28 = pneg %p22
    %p29 = scmp.eq.s32.totalorder %s13, 27
    %p30 = por %p28, %p29
    %p31 = scmp.ne.s32.totalorder %s23, %s26
    %p32 = scmp.eq.s32.totalorder %s13, 0
    %p33 = por %p31, %p32
    %p34 = scmp.ne.s32.totalorder %s23, %s26
    %p35 = scmp.eq.s32.totalorder %s18, 27
    %p36 = por %p34, %p35
    %p37 = scmp.ne.s32.totalorder %s26, %s27
    %p38 = scmp.eq.s32.totalorder %s18, 0
    %p39 = por %p37, %p38
    %p40 = scmp.ne.s32.totalorder %s26, %s27
    %p41 = scmp.eq.s32.totalorder %s19, 27
    %p42 = por %p40, %p41
    %p44 = scmp.ne.s32.totalorder %s27, %s43
    %p45 = scmp.eq.s32.totalorder %s19, 0
    %p46 = por %p44, %p45
    %s48 = sadd.s32 %s47, 1
    %p51 = scmp.eq.s32.totalorder %s13, 27
    %p52 = scmp.ne.s32.totalorder %s47, %s49
    %p53 = scmp.eq.s32.totalorder %s13, 0
    %p54 = por %p52, %p53
    %p55 = scmp.ne.s32.totalorder %s47, %s49
    %p56 = scmp.eq.s32.totalorder %s18, 27
    %p57 = por %p55, %p56
    %p58 = scmp.ne.s32.totalorder %s49, %s50
    %p59 = scmp.eq.s32.totalorder %s18, 0
    %p60 = por %p58, %p59
    %p61 = scmp.ne.s32.totalorder %s49, %s50
    %p62 = scmp.eq.s32.totalorder %s19, 27
    %p63 = por %p61, %p62
    %p65 = scmp.ne.s32.totalorder %s50, %s64
    %p66 = scmp.eq.s32.totalorder %s19, 0
    %p67 = por %p65, %p66
    %s69 = sadd.s32 %s68, 1
    %p72 = scmp.eq.s32.totalorder %s13, 27
    %p73 = scmp.ne.s32.totalorder %s68, %s70
    %p74 = scmp.eq.s32.totalorder %s13, 0
    %p75 = por %p73, %p74
    %p76 = scmp.ne.s32.totalorder %s68, %s70
    %p77 = scmp.eq.s32.totalorder %s18, 27
    %p78 = por %p76, %p77
    %p79 = scmp.ne.s32.totalorder %s70, %s71
    %p80 = scmp.eq.s32.totalorder %s18, 0
    %p81 = por %p79, %p80
    %p82 = scmp.ne.s32.totalorder %s70, %s71
    %p83 = scmp.eq.s32.totalorder %s19, 27
    %p84 = por %p82, %p83
    %p86 = scmp.ne.s32.totalorder %s71, %s85
    %p87 = scmp.eq.s32.totalorder %s19, 0
    %p88 = por %p86, %p87
    %s90 = sadd.s32 %s89, 1
    %p93 = scmp.eq.s32.totalorder %s13, 27
    %p94 = scmp.ne.s32.totalorder %s89, %s91
    %p95 = scmp.eq.s32.totalorder %s13, 0
    %p96 = por %p94, %p95
    %p97 = scmp.ne.s32.totalorder %s89, %s91
    %p98 = scmp.eq.s32.totalorder %s18, 27
    %p99 = por %p97, %p98
    %p100 = scmp.ne.s32.totalorder %s91, %s92
    %p101 = scmp.eq.s32.totalorder %s18, 0
    %p102 = por %p100, %p101
    %p103 = scmp.ne.s32.totalorder %s91, %s92
    %p104 = scmp.eq.s32.totalorder %s19, 27
    %p105 = por %p103, %p104
    %p107 = scmp.ne.s32.totalorder %s92, %s106
    %p108 = scmp.eq.s32.totalorder %s19, 0
    %p109 = por %p107, %p108
    %s111 = sadd.s32 %s110, 1
    %p114 = scmp.eq.s32.totalorder %s13, 27
    %p115 = scmp.ne.s32.totalorder %s110, %s112
    %p116 = scmp.eq.s32.totalorder %s13, 0
    %p117 = por %p115, %p116
    %p118 = scmp.ne.s32.totalorder %s110, %s112
    %p119 = scmp.eq.s32.totalorder %s18, 27
    %p120 = por %p118, %p119
    %p121 = scmp.ne.s32.totalorder %s112, %s113
    %p122 = scmp.eq.s32.totalorder %s18, 0
    %p123 = por %p121, %p122
    %p124 = scmp.ne.s32.totalorder %s112, %s113
    %p125 = scmp.eq.s32.totalorder %s19, 27
    %p126 = por %p124, %p125
    %p128 = scmp.ne.s32.totalorder %s113, %s127
    %p129 = scmp.eq.s32.totalorder %s19, 0
    %p130 = por %p128, %p129
    %s132 = sadd.s32 %s131, 1
    %p135 = scmp.eq.s32.totalorder %s13, 27
    %p136 = scmp.ne.s32.totalorder %s131, %s133
    %p137 = scmp.eq.s32.totalorder %s13, 0
    %p138 = por %p136, %p137
    %p139 = scmp.ne.s32.totalorder %s131, %s133
    %p140 = scmp.eq.s32.totalorder %s18, 27
    %p141 = por %p139, %p140
    %p142 = scmp.ne.s32.totalorder %s133, %s134
    %p143 = scmp.eq.s32.totalorder %s18, 0
    %p144 = por %p142, %p143
    %p145 = scmp.ne.s32.totalorder %s133, %s134
    %p146 = scmp.eq.s32.totalorder %s19, 27
    %p147 = por %p145, %p146
    %p149 = scmp.ne.s32.totalorder %s134, %s148
    %p150 = scmp.eq.s32.totalorder %s19, 0
    %p151 = por %p149, %p150
    %s153 = sadd.s32 %s152, 1
    %p156 = scmp.eq.s32.totalorder %s13, 27
    %p157 = scmp.ne.s32.totalorder %s152, %s154
    %p158 = scmp.eq.s32.totalorder %s13, 0
    %p159 = por %p157, %p158
    %p160 = scmp.ne.s32.totalorder %s152, %s154
    %p161 = scmp.eq.s32.totalorder %s18, 27
    %p162 = por %p160, %p161
    %p163 = scmp.ne.s32.totalorder %s154, %s155
    %p164 = scmp.eq.s32.totalorder %s18, 0
    %p165 = por %p163, %p164
    %p166 = scmp.ne.s32.totalorder %s154, %s155
    %p167 = scmp.eq.s32.totalorder %s19, 27
    %p168 = por %p166, %p167
    %p170 = scmp.ne.s32.totalorder %s155, %s169
    %p171 = scmp.eq.s32.totalorder %s19, 0
    %p172 = por %p170, %p171
    %s173 = ssub.s32 %s13, %s20
    %p174 = scmp.eq.s32.totalorder %s173, 0
    %s176 = sadd.s32 %s175, 1
    %s177 = scalar_select %p174, %s175, %s176
    %p180 = pneg %p174
    %p181 = scmp.eq.s32.totalorder %s13, 27
    %p182 = por %p180, %p181
    %p183 = scmp.ne.s32.totalorder %s175, %s178
    %p184 = scmp.eq.s32.totalorder %s13, 0
    %p185 = por %p183, %p184
    %p186 = scmp.ne.s32.totalorder %s175, %s178
    %p187 = scmp.eq.s32.totalorder %s18, 27
    %p188 = por %p186, %p187
    %p189 = scmp.ne.s32.totalorder %s178, %s179
    %p190 = scmp.eq.s32.totalorder %s18, 0
    %p191 = por %p189, %p190
    %p192 = scmp.ne.s32.totalorder %s178, %s179
    %p193 = scmp.eq.s32.totalorder %s19, 27
    %p194 = por %p192, %p193
    %p196 = scmp.ne.s32.totalorder %s179, %s195
    %p197 = scmp.eq.s32.totalorder %s19, 0
    %p198 = por %p196, %p197
    %p199 = scmp.le.s32.totalorder 1, %s13
    %p200 = scmp.lt.s32.totalorder %s13, 29
    %p201 = pnand %p199, %p200
    %p202 = pneg %p201
    // Predicated region
    $region9: #{run.5} parent=5 // pred_check
      _
    $region10: #{run.5} parent=5 // pred_check_branch
      %204 = sbr.rel (%p201) target = $region12
    $region11: #{run.5} parent=5 // pred_region
      %s205 = ssub.s32 %s13, 1
      // Predicated region
      $region13: #{run.5} parent=11 // pred_check
        %p206 = pneg %p60
      $region14: #{run.5} parent=11 // pred_check_branch
        %208 = sbr.rel (%p206) target = $region16
      $region15: #{run.5} parent=11 // pred_region
        _
      $region16: #{run.5} parent=11 // pred_fallthru
        _
      // Predicated region
      $region17: #{run.5} parent=11 // pred_check
        %p209 = pneg %p81
      $region18: #{run.5} parent=11 // pred_check_branch
        %211 = sbr.rel (%p209) target = $region20
      $region19: #{run.5} parent=11 // pred_region
        _
      $region20: #{run.5} parent=11 // pred_fallthru
        _
      // Predicated region
      $region21: #{run.5} parent=11 // pred_check
        %p212 = pneg %p102
      $region22: #{run.5} parent=11 // pred_check_branch
        %214 = sbr.rel (%p212) target = $region24
      $region23: #{run.5} parent=11 // pred_region
        _
      $region24: #{run.5} parent=11 // pred_fallthru
        _
      // Predicated region
      $region25: #{run.5} parent=11 // pred_check
        %p215 = pneg %p123
      $region26: #{run.5} parent=11 // pred_check_branch
        %217 = sbr.rel (%p215) target = $region28
      $region27: #{run.5} parent=11 // pred_region
        _
      $region28: #{run.5} parent=11 // pred_fallthru
        _
      // Predicated region
      $region29: #{run.5} parent=11 // pred_check
        %p218 = pneg %p144
      $region30: #{run.5} parent=11 // pred_check_branch
        %220 = sbr.rel (%p218) target = $region32
      $region31: #{run.5} parent=11 // pred_region
        _
      $region32: #{run.5} parent=11 // pred_fallthru
        _
      // Predicated region
      $region33: #{run.5} parent=11 // pred_check
        %p221 = pneg %p165
      $region34: #{run.5} parent=11 // pred_check_branch
        %223 = sbr.rel (%p221) target = $region36
      $region35: #{run.5} parent=11 // pred_region
        _
      $region36: #{run.5} parent=11 // pred_fallthru
        _
    $region12: #{run.5} parent=5 // pred_fallthru
      _
    %p224 = scmp.lt.s32.totalorder %s13, 28
    // Predicated region
    $region37: #{run.5} parent=5 // pred_check
      %p225 = pneg %p224
    $region38: #{run.5} parent=5 // pred_check_branch
      %227 = sbr.rel (%p225) target = $region40
    $region39: #{run.5} parent=5 // pred_region
      // Predicated region
      $region41: #{run.5} parent=39 // pred_check
        %p228 = pneg %p33
      $region42: #{run.5} parent=39 // pred_check_branch
        %230 = sbr.rel (%p228) target = $region44
      $region43: #{run.5} parent=39 // pred_region
        %p231 = scmp.lt.s32.totalorder %s13, 27
        %s232 = scalar_select %p231, %s13, 27
        %s233 = smul.addr %s232, 4
        %s234 = scalar_lea.vmem %s0, %s233
      $region44: #{run.5} parent=39 // pred_fallthru
        _
    $region40: #{run.5} parent=5 // pred_fallthru
      _
    %p235 = scmp.le.s32.totalorder 1, %s13
    %p236 = scmp.lt.s32.totalorder %s13, 29
    %p237 = pnand %p235, %p236
    %p238 = pneg %p237
    // Predicated region
    $region45: #{run.5} parent=5 // pred_check
      _
    $region46: #{run.5} parent=5 // pred_check_branch
      %240 = sbr.rel (%p237) target = $region48
    $region47: #{run.5} parent=5 // pred_region
      %s241 = ssub.s32 %s13, 1
      %p242 = scmp.lt.s32.totalorder %s18, 27
      %s243 = scalar_select %p242, %s18, 27
      %s244 = smul.addr %s243, 4
      %s245 = scalar_lea.vmem %s0, %s244
      %p246 = pneg %p39
      %p247 = pneg %p36
      %p248 = pneg %p60
      %p249 = pneg %p57
      %p250 = pneg %p81
      %p251 = pneg %p78
      %p252 = pneg %p102
      %p253 = pneg %p99
      %p254 = pneg %p123
      %p255 = pneg %p120
      %p256 = pneg %p144
      %p257 = pneg %p141
      %p258 = pneg %p165
      %p259 = pneg %p162
      %p260 = pneg %p191
      %p261 = pneg %p188
      %p262 = scmp.lt.s32.totalorder %s18, 27
      %s263 = scalar_select %p262, %s18, 27
      %s264 = smul.addr %s263, 4
      %s265 = scalar_lea.vmem %s7, %s264
      %p266 = scmp.lt.s32.totalorder %s18, 27
      %s267 = scalar_select %p266, %s18, 27
      %s268 = smul.addr %s267, 4
      %s269 = scalar_lea.vmem %s0, %s268
      %p270 = scmp.lt.s32.totalorder %s18, 27
      %s271 = scalar_select %p270, %s18, 27
      %s272 = smul.addr %s271, 4
      %s273 = scalar_lea.vmem %s7, %s272
      %v275 = vld [vmem:[%s269] sm:$0x7]
      %v276 = vunpack.c.l.bf16 %v275
      %v277 = vld [vmem:[%s1] sm:$0x1]
      %v278 = vld [vmem:[%s2] sm:$0x1]
      %vm279 = vcmask 520192
      %v280 = vsel %vm279, %v276, 0.0
      %281 = vadd.xlane.f32.xlu0 %v280
      %v282 = vpop.xlane.xlu0 %281
      %v283 = vrcp.pop 64.0
      %v284 = vmul.f32 %v282, %v283
      %v285 = vsub.f32 %v276, %v284
      %v286 = vmul.f32 %v285, %v285
      %v287 = vsel %vm279, %v286, 0.0
      %288 = vadd.xlane.f32.xlu0 %v287
      %v289 = vpop.xlane.xlu0 %288
      %v290 = vmul.f32 %v289, %v283
      %v291 = vadd.f32 %v290, 1e-05
      %v292 = vrsqrt.pop %v291
      %v293 = vmul.f32 %v285, %v292
      %v295 = vlaneseq
      %v296 = vshrl.u32 %v295, 7
      %v297 = vsub.s32 0, %v296
      %v298 = vrot.slane %v277, %v297
      %v300 = vmul.f32 %v293, %v298
      %v302 = vlaneseq
      %v303 = vshrl.u32 %v302, 7
      %v304 = vsub.s32 0, %v303
      %v305 = vrot.slane %v278, %v304
      %v307 = vadd.f32 %v300, %v305
      %v308 = vpack.c.bf16 %v307, %v307
      %v309 = vld [vmem:[%s3] sm:$0xff]
      %v310 = vld [vmem:[%s3 + $0x8] sm:$0xff]
      %v311 = vld [vmem:[%s3 + $0x10] sm:$0xff]
      %v312 = vld [vmem:[%s3 + $0x18] sm:$0xff]
      %v313 = vld [vmem:[%s3 + $0x20] sm:$0xff]
      %v314 = vld [vmem:[%s3 + $0x28] sm:$0xff]
      %v315 = vld [vmem:[%s3 + $0x30] sm:$0xff]
      %v316 = vld [vmem:[%s3 + $0x38] sm:$0xff]
      %v317 = vld [vmem:[%s4] sm:$0x3]
      %v319 = vlaneseq
      %v320 = vshrl.u32 %v319, 7
      %v321 = vsub.s32 0, %v320
      %v322 = vrot.slane %v317, %v321
      %v323 = vlaneseq
      %v324 = vshrl.u32 %v323, 7
      %v325 = vsub.s32 1, %v324
      %v326 = vrot.slane %v317, %v325
      %v337 = vunpack.c.l.b16 %v309
      %v338 = vunpack.c.h.b16 %v309
      %v339 = vunpack.c.l.b16 %v310
      %v340 = vunpack.c.h.b16 %v310
      %v341 = vunpack.c.l.b16 %v311
      %v342 = vunpack.c.h.b16 %v311
      %v343 = vunpack.c.l.b16 %v312
      %v344 = vunpack.c.h.b16 %v312
      %v345 = vunpack.c.l.b16 %v313
      %v346 = vunpack.c.h.b16 %v313
      %v347 = vunpack.c.l.b16 %v314
      %v348 = vunpack.c.h.b16 %v314
      %v349 = vunpack.c.l.b16 %v315
      %v350 = vunpack.c.h.b16 %v315
      %v351 = vunpack.c.l.b16 %v316
      %v352 = vunpack.c.h.b16 %v316
      %v353 = vpack.c.b16 %v339, %v337
      %v354 = vpack.c.b16 %v340, %v338
      %v355 = vpack.c.b16 %v343, %v341
      %v356 = vpack.c.b16 %v344, %v342
      %v357 = vpack.c.b16 %v347, %v345
      %v358 = vpack.c.b16 %v348, %v346
      %v359 = vpack.c.b16 %v351, %v349
      %v360 = vpack.c.b16 %v352, %v350
      %vm369 = vcmask 523264
      %v371 = vsel %vm369, %v308, 0
      %373 = vmatprep.subr.bf16.mxu0 %v354
      %374 = vmatpush1.bf16.msra.mxu0 %v353
      %375 = vmatprep.subr.bf16.mxu0 %v356
      %376 = vmatpush1.bf16.msra.mxu0 %v355
      %377 = vmatprep.subr.bf16.mxu0 %v358
      %378 = vmatpush1.bf16.msra.mxu0 %v357
      %379 = vmatprep.subr.bf16.mxu0 %v360
      %380 = vmatpush1.bf16.msra.mxu0 %v359
      %381 = vmatprep.subr.bf16.mxu0 0
      %382 = vmatpush1.bf16.msra.mxu0 0
      %383 = vmatprep.subr.bf16.mxu0 0
      %384 = vmatpush1.bf16.msra.mxu0 0
      %385 = vmatprep.subr.bf16.mxu0 0
      %386 = vmatpush1.bf16.msra.mxu0 0
      %387 = vmatprep.subr.bf16.mxu0 0
      %388 = vmatpush1.bf16.msra.mxu0 0
      %389 = vmatprep.subr.bf16.mxu0 0
      %390 = vmatpush1.bf16.msra.mxu0 0
      %391 = vmatprep.subr.bf16.mxu0 0
      %392 = vmatpush1.bf16.msra.mxu0 0
      %393 = vmatprep.subr.bf16.mxu0 0
      %394 = vmatpush1.bf16.msra.mxu0 0
      %395 = vmatprep.subr.bf16.mxu0 0
      %396 = vmatpush1.bf16.msra.mxu0 0
      %397 = vmatprep.subr.bf16.mxu0 0
      %398 = vmatpush1.bf16.msra.mxu0 0
      %399 = vmatprep.subr.bf16.mxu0 0
      %400 = vmatpush1.bf16.msra.mxu0 0
      %401 = vmatprep.subr.bf16.mxu0 0
      %402 = vmatpush1.bf16.msra.mxu0 0
      %403 = vmatprep.subr.bf16.mxu0 0
      %404 = vmatpush1.bf16.msra.mxu0 0
      %405 = vmatprep.mubr.bf16.mxu0 0
      %406 = vmatmul.mubr.bf16.gmra.mrb[0].mxu0 %v371
      %v407 = vpop.f32.mrb[0].mxu0
      %v408 = vadd.f32 %v322, %v407
      %v409 = vpop.f32.mrb[0].mxu0
      %v410 = vadd.f32 %v326, %v409
      %v411 = vpop.f32.mrb[0].mxu0
      %v412 = vpop.f32.mrb[0].mxu0
      %413 = vdwg.mxu0
      %v414 = vmul.f32 %v408, 1.702
      %v415 = vmul.f32 %v410, 1.702
      %v416 = vxor.u32 %v414, 2147483648
      %v417 = vxor.u32 %v415, 2147483648
      %v418 = vmul.f32 %v416, 1.442695
      %v419 = vpow.pop %v418
      %v420 = vmul.f32 %v417, 1.442695
      %v421 = vpow.pop %v420
      %v422 = vadd.f32 %v419, 1.0
      %v423 = vadd.f32 %v421, 1.0
      %v424 = vrcp.pop %v422
      %v425 = vmul.f32 1.0, %v424
      %v426 = vrcp.pop %v423
      %v427 = vmul.f32 1.0, %v426
      %v428 = vmul.f32 %v408, %v425
      %v429 = vmul.f32 %v410, %v427
      %v430 = vpack.c.bf16 %v428, %v428
      %v431 = vpack.c.bf16 %v429, %v429
      %v432 = vld [vmem:[%s5] sm:$0xf]
      %v433 = vld [vmem:[%s5 + $0x4] sm:$0xf]
      %v434 = vld [vmem:[%s5 + $0x8] sm:$0xf]
      %v435 = vld [vmem:[%s5 + $0xc] sm:$0xf]
      %v436 = vld [vmem:[%s5 + $0x10] sm:$0xf]
      %v437 = vld [vmem:[%s5 + $0x14] sm:$0xf]
      %v438 = vld [vmem:[%s5 + $0x18] sm:$0xf]
      %v439 = vld [vmem:[%s5 + $0x1c] sm:$0xf]
      %v440 = vld [vmem:[%s5 + $0x20] sm:$0xf]
      %v441 = vld [vmem:[%s5 + $0x24] sm:$0xf]
      %v442 = vld [vmem:[%s5 + $0x28] sm:$0xf]
      %v443 = vld [vmem:[%s5 + $0x2c] sm:$0xf]
      %v444 = vld [vmem:[%s5 + $0x30] sm:$0xf]
      %v445 = vld [vmem:[%s5 + $0x34] sm:$0xf]
      %v446 = vld [vmem:[%s5 + $0x38] sm:$0xf]
      %v447 = vld [vmem:[%s5 + $0x3c] sm:$0xf]
      %v448 = vld [vmem:[%s5 + $0x40] sm:$0xf]
      %v449 = vld [vmem:[%s5 + $0x44] sm:$0xf]
      %v450 = vld [vmem:[%s5 + $0x48] sm:$0xf]
      %v451 = vld [vmem:[%s5 + $0x4c] sm:$0xf]
      %v452 = vld [vmem:[%s5 + $0x50] sm:$0xf]
      %v453 = vld [vmem:[%s5 + $0x54] sm:$0xf]
      %v454 = vld [vmem:[%s5 + $0x58] sm:$0xf]
      %v455 = vld [vmem:[%s5 + $0x5c] sm:$0xf]
      %v456 = vld [vmem:[%s5 + $0x60] sm:$0xf]
      %v457 = vld [vmem:[%s5 + $0x64] sm:$0xf]
      %v458 = vld [vmem:[%s5 + $0x68] sm:$0xf]
      %v459 = vld [vmem:[%s5 + $0x6c] sm:$0xf]
      %v460 = vld [vmem:[%s5 + $0x70] sm:$0xf]
      %v461 = vld [vmem:[%s5 + $0x74] sm:$0xf]
      %v462 = vld [vmem:[%s5 + $0x78] sm:$0xf]
      %v463 = vld [vmem:[%s5 + $0x7c] sm:$0xf]
      %v464 = vld [vmem:[%s6] sm:$0x1]
      %v466 = vlaneseq
      %v467 = vshrl.u32 %v466, 7
      %v468 = vsub.s32 0, %v467
      %v469 = vrot.slane %v464, %v468
      %v503 = vunpack.c.l.b16 %v432
      %v504 = vunpack.c.l.b16 %v433
      %v505 = vunpack.c.l.b16 %v434
      %v506 = vunpack.c.l.b16 %v435
      %v507 = vunpack.c.l.b16 %v436
      %v508 = vunpack.c.l.b16 %v437
      %v509 = vunpack.c.l.b16 %v438
      %v510 = vunpack.c.l.b16 %v439
      %v511 = vunpack.c.l.b16 %v440
      %v512 = vunpack.c.l.b16 %v441
      %v513 = vunpack.c.l.b16 %v442
      %v514 = vunpack.c.l.b16 %v443
      %v515 = vunpack.c.l.b16 %v444
      %v516 = vunpack.c.l.b16 %v445
      %v517 = vunpack.c.l.b16 %v446
      %v518 = vunpack.c.l.b16 %v447
      %v519 = vunpack.c.l.b16 %v448
      %v520 = vunpack.c.l.b16 %v449
      %v521 = vunpack.c.l.b16 %v450
      %v522 = vunpack.c.l.b16 %v451
      %v523 = vunpack.c.l.b16 %v452
      %v524 = vunpack.c.l.b16 %v453
      %v525 = vunpack.c.l.b16 %v454
      %v526 = vunpack.c.l.b16 %v455
      %v527 = vunpack.c.l.b16 %v456
      %v528 = vunpack.c.l.b16 %v457
      %v529 = vunpack.c.l.b16 %v458
      %v530 = vunpack.c.l.b16 %v459
      %v531 = vunpack.c.l.b16 %v460
      %v532 = vunpack.c.l.b16 %v461
      %v533 = vunpack.c.l.b16 %v462
      %v534 = vunpack.c.l.b16 %v463
      %v535 = vpack.c.b16 %v504, %v503
      %v536 = vpack.c.b16 %v506, %v505
      %v537 = vpack.c.b16 %v508, %v507
      %v538 = vpack.c.b16 %v510, %v509
      %v539 = vpack.c.b16 %v512, %v511
      %v540 = vpack.c.b16 %v514, %v513
      %v541 = vpack.c.b16 %v516, %v515
      %v542 = vpack.c.b16 %v518, %v517
      %v543 = vpack.c.b16 %v520, %v519
      %v544 = vpack.c.b16 %v522, %v521
      %v545 = vpack.c.b16 %v524, %v523
      %v546 = vpack.c.b16 %v526, %v525
      %v547 = vpack.c.b16 %v528, %v527
      %v548 = vpack.c.b16 %v530, %v529
      %v549 = vpack.c.b16 %v532, %v531
      %v550 = vpack.c.b16 %v534, %v533
      %567 = vmatprep.subr.bf16.mxu0 0
      %568 = vmatpush1.bf16.msra.mxu0 %v535
      %569 = vmatprep.subr.bf16.mxu0 0
      %570 = vmatpush1.bf16.msra.mxu0 %v536
      %571 = vmatprep.subr.bf16.mxu0 0
      %572 = vmatpush1.bf16.msra.mxu0 %v537
      %573 = vmatprep.subr.bf16.mxu0 0
      %574 = vmatpush1.bf16.msra.mxu0 %v538
      %575 = vmatprep.subr.bf16.mxu0 0
      %576 = vmatpush1.bf16.msra.mxu0 %v539
      %577 = vmatprep.subr.bf16.mxu0 0
      %578 = vmatpush1.bf16.msra.mxu0 %v540
      %579 = vmatprep.subr.bf16.mxu0 0
      %580 = vmatpush1.bf16.msra.mxu0 %v541
      %581 = vmatprep.subr.bf16.mxu0 0
      %582 = vmatpush1.bf16.msra.mxu0 %v542
      %583 = vmatprep.subr.bf16.mxu0 0
      %584 = vmatpush1.bf16.msra.mxu0 %v543
      %585 = vmatprep.subr.bf16.mxu0 0
      %586 = vmatpush1.bf16.msra.mxu0 %v544
      %587 = vmatprep.subr.bf16.mxu0 0
      %588 = vmatpush1.bf16.msra.mxu0 %v545
      %589 = vmatprep.subr.bf16.mxu0 0
      %590 = vmatpush1.bf16.msra.mxu0 %v546
      %591 = vmatprep.subr.bf16.mxu0 0
      %592 = vmatpush1.bf16.msra.mxu0 %v547
      %593 = vmatprep.subr.bf16.mxu0 0
      %594 = vmatpush1.bf16.msra.mxu0 %v548
      %595 = vmatprep.subr.bf16.mxu0 0
      %596 = vmatpush1.bf16.msra.mxu0 %v549
      %597 = vmatprep.subr.bf16.mxu0 0
      %598 = vmatpush1.bf16.msra.mxu0 %v550
      %599 = vmatprep.mubr.bf16.mxu0 %v431
      %600 = vmatmul.mubr.bf16.gmra.mrb[0].mxu0 %v430
      %v601 = vpop.f32.mrb[0].mxu0
      %v602 = vadd.f32 %v469, %v601
      %v603 = vpop.f32.mrb[0].mxu0
      %v604 = vpop.f32.mrb[0].mxu0
      %v605 = vpop.f32.mrb[0].mxu0
      %606 = vdwg.mxu0
      %v607 = vadd.f32 %v602, %v276
      %v608 = vpack.c.bf16 %v607, %v607
      %vm609 = vcmask 518144
      %vm610 = vsmask.f32 2304
      %vm611 = vmand %vm609, %vm610
      %v612 = vld [vmem:[%s273] sm:$0x7]
      %v613 = vsel %vm611, %v608, %v612
      %614 = vst [vmem:[%s273] sm:$0x7] %v613
      %p615 = scmp.lt.s32.totalorder %s18, 27
      %s616 = scalar_select %p615, %s18, 27
      %s617 = smul.addr %s616, 4
      %s618 = scalar_lea.vmem %s7, %s617
      // Predicated region
      $region49: #{run.5} parent=47 // pred_check
        %p619 = pneg %p188
      $region50: #{run.5} parent=47 // pred_check_branch
        %621 = sbr.rel (%p619) target = $region52
      $region51: #{run.5} parent=47 // pred_region
        _
      $region52: #{run.5} parent=47 // pred_fallthru
        _
    $region48: #{run.5} parent=5 // pred_fallthru
      _
    %p622 = scmp.le.s32.totalorder 2, %s13
    // Predicated region
    $region53: #{run.5} parent=5 // pred_check
      %p623 = pneg %p622
    $region54: #{run.5} parent=5 // pred_check_branch
      %625 = sbr.rel (%p623) target = $region56
    $region55: #{run.5} parent=5 // pred_region
      %s626 = ssub.s32 %s13, 2
      // Predicated region
      $region57: #{run.5} parent=55 // pred_check
        %p627 = pneg %p194
      $region58: #{run.5} parent=55 // pred_check_branch
        %629 = sbr.rel (%p627) target = $region60
      $region59: #{run.5} parent=55 // pred_region
        %p630 = scmp.lt.s32.totalorder %s19, 27
        %s631 = scalar_select %p630, %s19, 27
        %s632 = smul.addr %s631, 4
        %s633 = scalar_lea.vmem %s7, %s632
      $region60: #{run.5} parent=55 // pred_fallthru
        _
    $region56: #{run.5} parent=5 // pred_fallthru
      _
  $region6: #{run.5} parent=0 // loop_footer
    %s17 = sadd.s32 1, %s13
  $region7: #{run.5} parent=0 // loop_footer_branch
    %12 = sbr.rel target = $region3
  $region8: #{run.5} parent=0 // loop_exit
    _

// kernel: run.4
$region0: #{run.4}
  #allocation0 [shape = 'u32[]', space=smem, size = 0x4, offset = 0x4, fixed_abs, tag = 'smem constant byte address 0x4 - core index']
  #allocation1 [shape = 'u32[144,128]{1,0:T(1,128)}', space=vmem, size = 0x12000, scoped, tag = 'internal scratch']
  %s0 = inlined_call_operand.vmem [shape: bf16[28,5,64], index: 0, kind: input, shape index: {}]
  %s1 = inlined_call_operand.vmem [shape: f32[1,64], index: 1, kind: input, shape index: {}]
  %s2 = inlined_call_operand.vmem [shape: f32[1,64], index: 2, kind: input, shape index: {}, may-alias: {2,6}]
  %s3 = inlined_call_operand.vmem [shape: bf16[64,192], index: 3, kind: input, shape index: {}]
  %s4 = inlined_call_operand.vmem [shape: f32[1,192], index: 4, kind: input, shape index: {}]
  %s5 = inlined_call_operand.vmem [shape: bf16[64,64], index: 5, kind: input, shape index: {}]
  %s6 = inlined_call_operand.vmem [shape: f32[1,64], index: 6, kind: input, shape index: {}, may-alias: {2,6}]
  %s7 = inlined_call_operand.vmem [shape: bf16[28,5,64], index: 7, kind: output, shape index: {}]
  %s8 = sld [smem:[#allocation0]]
  $region61: #{run.4} parent=0
    _
  %s10 = ssub.s32 1, %s8
  %s11 = scalar_select 0, %s10, %s8
  loop: start=0, step=1, limit=30
  $region2: #{run.4} parent=0 // loop_pre_header
    _
  $region3: #{run.4} parent=0 // loop_header
    %s13 = sphi 0, %s17
    %p14 = scmp.ge.s32.totalorder %s13, 30
    %s23 = sphi 0, %s25
    %s26 = sphi 0, %s23
    %s27 = sphi 0, %s26
    %s43 = sphi 0, %s27
    %s47 = sphi 0, %s47
    %s49 = sphi 0, %s47
    %s50 = sphi 0, %s49
    %s64 = sphi 0, %s50
    %s68 = sphi 0, %s68
    %s70 = sphi 0, %s68
    %s71 = sphi 0, %s70
    %s85 = sphi 0, %s71
    %s89 = sphi 0, %s89
    %s91 = sphi 0, %s89
    %s92 = sphi 0, %s91
    %s106 = sphi 0, %s92
    %s110 = sphi 0, %s110
    %s112 = sphi 0, %s110
    %s113 = sphi 0, %s112
    %s127 = sphi 0, %s113
    %s131 = sphi 0, %s131
    %s133 = sphi 0, %s131
    %s134 = sphi 0, %s133
    %s148 = sphi 0, %s134
    %s152 = sphi 0, %s152
    %s154 = sphi 0, %s152
    %s155 = sphi 0, %s154
    %s169 = sphi 0, %s155
    %s175 = sphi 0, %s177
    %s178 = sphi 0, %s175
    %s179 = sphi 0, %s178
    %s195 = sphi 0, %s179
  $region4: #{run.4} parent=0 // loop_header_branch
    %16 = sbr.rel (%p14) target = $region8
  $region5: #{run.4} parent=0 // loop_body
    %s18 = ssub.s32 %s13, 1
    %s19 = ssub.s32 %s13, 2
    %s20 = sadd.s32 %s13, 1
    %s21 = ssub.s32 %s13, %s20
    %p22 = scmp.eq.s32.totalorder %s21, 0
    %s24 = sadd.s32 %s23, 1
    %s25 = scalar_select %p22, %s23, %s24
    %p28 = pneg %p22
    %p29 = scmp.eq.s32.totalorder %s13, 27
    %p30 = por %p28, %p29
    %p31 = scmp.ne.s32.totalorder %s23, %s26
    %p32 = scmp.eq.s32.totalorder %s13, 0
    %p33 = por %p31, %p32
    %p34 = scmp.ne.s32.totalorder %s23, %s26
    %p35 = scmp.eq.s32.totalorder %s18, 27
    %p36 = por %p34, %p35
    %p37 = scmp.ne.s32.totalorder %s26, %s27
    %p38 = scmp.eq.s32.totalorder %s18, 0
    %p39 = por %p37, %p38
    %p40 = scmp.ne.s32.totalorder %s26, %s27
    %p41 = scmp.eq.s32.totalorder %s19, 27
    %p42 = por %p40, %p41
    %p44 = scmp.ne.s32.totalorder %s27, %s43
    %p45 = scmp.eq.s32.totalorder %s19, 0
    %p46 = por %p44, %p45
    %s48 = sadd.s32 %s47, 1
    %p51 = scmp.eq.s32.totalorder %s13, 27
    %p52 = scmp.ne.s32.totalorder %s47, %s49
    %p53 = scmp.eq.s32.totalorder %s13, 0
    %p54 = por %p52, %p53
    %p55 = scmp.ne.s32.totalorder %s47, %s49
    %p56 = scmp.eq.s32.totalorder %s18, 27
    %p57 = por %p55, %p56
    %p58 = scmp.ne.s32.totalorder %s49, %s50
    %p59 = scmp.eq.s32.totalorder %s18, 0
    %p60 = por %p58, %p59
    %p61 = scmp.ne.s32.totalorder %s49, %s50
    %p62 = scmp.eq.s32.totalorder %s19, 27
    %p63 = por %p61, %p62
    %p65 = scmp.ne.s32.totalorder %s50, %s64
    %p66 = scmp.eq.s32.totalorder %s19, 0
    %p67 = por %p65, %p66
    %s69 = sadd.s32 %s68, 1
    %p72 = scmp.eq.s32.totalorder %s13, 27
    %p73 = scmp.ne.s32.totalorder %s68, %s70
    %p74 = scmp.eq.s32.totalorder %s13, 0
    %p75 = por %p73, %p74
    %p76 = scmp.ne.s32.totalorder %s68, %s70
    %p77 = scmp.eq.s32.totalorder %s18, 27
    %p78 = por %p76, %p77
    %p79 = scmp.ne.s32.totalorder %s70, %s71
    %p80 = scmp.eq.s32.totalorder %s18, 0
    %p81 = por %p79, %p80
    %p82 = scmp.ne.s32.totalorder %s70, %s71
    %p83 = scmp.eq.s32.totalorder %s19, 27
    %p84 = por %p82, %p83
    %p86 = scmp.ne.s32.totalorder %s71, %s85
    %p87 = scmp.eq.s32.totalorder %s19, 0
    %p88 = por %p86, %p87
    %s90 = sadd.s32 %s89, 1
    %p93 = scmp.eq.s32.totalorder %s13, 27
    %p94 = scmp.ne.s32.totalorder %s89, %s91
    %p95 = scmp.eq.s32.totalorder %s13, 0
    %p96 = por %p94, %p95
    %p97 = scmp.ne.s32.totalorder %s89, %s91
    %p98 = scmp.eq.s32.totalorder %s18, 27
    %p99 = por %p97, %p98
    %p100 = scmp.ne.s32.totalorder %s91, %s92
    %p101 = scmp.eq.s32.totalorder %s18, 0
    %p102 = por %p100, %p101
    %p103 = scmp.ne.s32.totalorder %s91, %s92
    %p104 = scmp.eq.s32.totalorder %s19, 27
    %p105 = por %p103, %p104
    %p107 = scmp.ne.s32.totalorder %s92, %s106
    %p108 = scmp.eq.s32.totalorder %s19, 0
    %p109 = por %p107, %p108
    %s111 = sadd.s32 %s110, 1
    %p114 = scmp.eq.s32.totalorder %s13, 27
    %p115 = scmp.ne.s32.totalorder %s110, %s112
    %p116 = scmp.eq.s32.totalorder %s13, 0
    %p117 = por %p115, %p116
    %p118 = scmp.ne.s32.totalorder %s110, %s112
    %p119 = scmp.eq.s32.totalorder %s18, 27
    %p120 = por %p118, %p119
    %p121 = scmp.ne.s32.totalorder %s112, %s113
    %p122 = scmp.eq.s32.totalorder %s18, 0
    %p123 = por %p121, %p122
    %p124 = scmp.ne.s32.totalorder %s112, %s113
    %p125 = scmp.eq.s32.totalorder %s19, 27
    %p126 = por %p124, %p125
    %p128 = scmp.ne.s32.totalorder %s113, %s127
    %p129 = scmp.eq.s32.totalorder %s19, 0
    %p130 = por %p128, %p129
    %s132 = sadd.s32 %s131, 1
    %p135 = scmp.eq.s32.totalorder %s13, 27
    %p136 = scmp.ne.s32.totalorder %s131, %s133
    %p137 = scmp.eq.s32.totalorder %s13, 0
    %p138 = por %p136, %p137
    %p139 = scmp.ne.s32.totalorder %s131, %s133
    %p140 = scmp.eq.s32.totalorder %s18, 27
    %p141 = por %p139, %p140
    %p142 = scmp.ne.s32.totalorder %s133, %s134
    %p143 = scmp.eq.s32.totalorder %s18, 0
    %p144 = por %p142, %p143
    %p145 = scmp.ne.s32.totalorder %s133, %s134
    %p146 = scmp.eq.s32.totalorder %s19, 27
    %p147 = por %p145, %p146
    %p149 = scmp.ne.s32.totalorder %s134, %s148
    %p150 = scmp.eq.s32.totalorder %s19, 0
    %p151 = por %p149, %p150
    %s153 = sadd.s32 %s152, 1
    %p156 = scmp.eq.s32.totalorder %s13, 27
    %p157 = scmp.ne.s32.totalorder %s152, %s154
    %p158 = scmp.eq.s32.totalorder %s13, 0
    %p159 = por %p157, %p158
    %p160 = scmp.ne.s32.totalorder %s152, %s154
    %p161 = scmp.eq.s32.totalorder %s18, 27
    %p162 = por %p160, %p161
    %p163 = scmp.ne.s32.totalorder %s154, %s155
    %p164 = scmp.eq.s32.totalorder %s18, 0
    %p165 = por %p163, %p164
    %p166 = scmp.ne.s32.totalorder %s154, %s155
    %p167 = scmp.eq.s32.totalorder %s19, 27
    %p168 = por %p166, %p167
    %p170 = scmp.ne.s32.totalorder %s155, %s169
    %p171 = scmp.eq.s32.totalorder %s19, 0
    %p172 = por %p170, %p171
    %s173 = ssub.s32 %s13, %s20
    %p174 = scmp.eq.s32.totalorder %s173, 0
    %s176 = sadd.s32 %s175, 1
    %s177 = scalar_select %p174, %s175, %s176
    %p180 = pneg %p174
    %p181 = scmp.eq.s32.totalorder %s13, 27
    %p182 = por %p180, %p181
    %p183 = scmp.ne.s32.totalorder %s175, %s178
    %p184 = scmp.eq.s32.totalorder %s13, 0
    %p185 = por %p183, %p184
    %p186 = scmp.ne.s32.totalorder %s175, %s178
    %p187 = scmp.eq.s32.totalorder %s18, 27
    %p188 = por %p186, %p187
    %p189 = scmp.ne.s32.totalorder %s178, %s179
    %p190 = scmp.eq.s32.totalorder %s18, 0
    %p191 = por %p189, %p190
    %p192 = scmp.ne.s32.totalorder %s178, %s179
    %p193 = scmp.eq.s32.totalorder %s19, 27
    %p194 = por %p192, %p193
    %p196 = scmp.ne.s32.totalorder %s179, %s195
    %p197 = scmp.eq.s32.totalorder %s19, 0
    %p198 = por %p196, %p197
    %p199 = scmp.le.s32.totalorder 1, %s13
    %p200 = scmp.lt.s32.totalorder %s13, 29
    %p201 = pnand %p199, %p200
    %p202 = pneg %p201
    // Predicated region
    $region9: #{run.4} parent=5 // pred_check
      _
    $region10: #{run.4} parent=5 // pred_check_branch
      %204 = sbr.rel (%p201) target = $region12
    $region11: #{run.4} parent=5 // pred_region
      %s205 = ssub.s32 %s13, 1
      // Predicated region
      $region13: #{run.4} parent=11 // pred_check
        %p206 = pneg %p60
      $region14: #{run.4} parent=11 // pred_check_branch
        %208 = sbr.rel (%p206) target = $region16
      $region15: #{run.4} parent=11 // pred_region
        _
      $region16: #{run.4} parent=11 // pred_fallthru
        _
      // Predicated region
      $region17: #{run.4} parent=11 // pred_check
        %p209 = pneg %p81
      $region18: #{run.4} parent=11 // pred_check_branch
        %211 = sbr.rel (%p209) target = $region20
      $region19: #{run.4} parent=11 // pred_region
        _
      $region20: #{run.4} parent=11 // pred_fallthru
        _
      // Predicated region
      $region21: #{run.4} parent=11 // pred_check
        %p212 = pneg %p102
      $region22: #{run.4} parent=11 // pred_check_branch
        %214 = sbr.rel (%p212) target = $region24
      $region23: #{run.4} parent=11 // pred_region
        _
      $region24: #{run.4} parent=11 // pred_fallthru
        _
      // Predicated region
      $region25: #{run.4} parent=11 // pred_check
        %p215 = pneg %p123
      $region26: #{run.4} parent=11 // pred_check_branch
        %217 = sbr.rel (%p215) target = $region28
      $region27: #{run.4} parent=11 // pred_region
        _
      $region28: #{run.4} parent=11 // pred_fallthru
        _
      // Predicated region
      $region29: #{run.4} parent=11 // pred_check
        %p218 = pneg %p144
      $region30: #{run.4} parent=11 // pred_check_branch
        %220 = sbr.rel (%p218) target = $region32
      $region31: #{run.4} parent=11 // pred_region
        _
      $region32: #{run.4} parent=11 // pred_fallthru
        _
      // Predicated region
      $region33: #{run.4} parent=11 // pred_check
        %p221 = pneg %p165
      $region34: #{run.4} parent=11 // pred_check_branch
        %223 = sbr.rel (%p221) target = $region36
      $region35: #{run.4} parent=11 // pred_region
        _
      $region36: #{run.4} parent=11 // pred_fallthru
        _
    $region12: #{run.4} parent=5 // pred_fallthru
      _
    %p224 = scmp.lt.s32.totalorder %s13, 28
    // Predicated region
    $region37: #{run.4} parent=5 // pred_check
      %p225 = pneg %p224
    $region38: #{run.4} parent=5 // pred_check_branch
      %227 = sbr.rel (%p225) target = $region40
    $region39: #{run.4} parent=5 // pred_region
      // Predicated region
      $region41: #{run.4} parent=39 // pred_check
        %p228 = pneg %p33
      $region42: #{run.4} parent=39 // pred_check_branch
        %230 = sbr.rel (%p228) target = $region44
      $region43: #{run.4} parent=39 // pred_region
        %p231 = scmp.lt.s32.totalorder %s13, 27
        %s232 = scalar_select %p231, %s13, 27
        %s233 = smul.addr %s232, 4
        %s234 = scalar_lea.vmem %s0, %s233
      $region44: #{run.4} parent=39 // pred_fallthru
        _
    $region40: #{run.4} parent=5 // pred_fallthru
      _
    %p235 = scmp.le.s32.totalorder 1, %s13
    %p236 = scmp.lt.s32.totalorder %s13, 29
    %p237 = pnand %p235, %p236
    %p238 = pneg %p237
    // Predicated region
    $region45: #{run.4} parent=5 // pred_check
      _
    $region46: #{run.4} parent=5 // pred_check_branch
      %240 = sbr.rel (%p237) target = $region48
    $region47: #{run.4} parent=5 // pred_region
      %s241 = ssub.s32 %s13, 1
      %p242 = scmp.lt.s32.totalorder %s18, 27
      %s243 = scalar_select %p242, %s18, 27
      %s244 = smul.addr %s243, 4
      %s245 = scalar_lea.vmem %s0, %s244
      %p246 = pneg %p39
      %p247 = pneg %p36
      %p248 = pneg %p60
      %p249 = pneg %p57
      %p250 = pneg %p81
      %p251 = pneg %p78
      %p252 = pneg %p102
      %p253 = pneg %p99
      %p254 = pneg %p123
      %p255 = pneg %p120
      %p256 = pneg %p144
      %p257 = pneg %p141
      %p258 = pneg %p165
      %p259 = pneg %p162
      %p260 = pneg %p191
      %p261 = pneg %p188
      %p262 = scmp.lt.s32.totalorder %s18, 27
      %s263 = scalar_select %p262, %s18, 27
      %s264 = smul.addr %s263, 4
      %s265 = scalar_lea.vmem %s7, %s264
      %p266 = scmp.lt.s32.totalorder %s18, 27
      %s267 = scalar_select %p266, %s18, 27
      %s268 = smul.addr %s267, 4
      %s269 = scalar_lea.vmem %s0, %s268
      %p270 = scmp.lt.s32.totalorder %s18, 27
      %s271 = scalar_select %p270, %s18, 27
      %s272 = smul.addr %s271, 4
      %s273 = scalar_lea.vmem %s7, %s272
      %v275 = vld [vmem:[%s269] sm:$0x7]
      %v276 = vunpack.c.l.bf16 %v275
      %v277 = vld [vmem:[%s1] sm:$0x1]
      %v278 = vld [vmem:[%s2] sm:$0x1]
      %vm279 = vcmask 520192
      %v280 = vsel %vm279, %v276, 0.0
      %281 = vadd.xlane.f32.xlu0 %v280
      %v282 = vpop.xlane.xlu0 %281
      %v283 = vrcp.pop 64.0
      %v284 = vmul.f32 %v282, %v283
      %v285 = vsub.f32 %v276, %v284
      %v286 = vmul.f32 %v285, %v285
      %v287 = vsel %vm279, %v286, 0.0
      %288 = vadd.xlane.f32.xlu0 %v287
      %v289 = vpop.xlane.xlu0 %288
      %v290 = vmul.f32 %v289, %v283
      %v291 = vadd.f32 %v290, 1e-05
      %v292 = vrsqrt.pop %v291
      %v293 = vmul.f32 %v285, %v292
      %v295 = vlaneseq
      %v296 = vshrl.u32 %v295, 7
      %v297 = vsub.s32 0, %v296
      %v298 = vrot.slane %v277, %v297
      %v300 = vmul.f32 %v293, %v298
      %v302 = vlaneseq
      %v303 = vshrl.u32 %v302, 7
      %v304 = vsub.s32 0, %v303
      %v305 = vrot.slane %v278, %v304
      %v307 = vadd.f32 %v300, %v305
      %v308 = vpack.c.bf16 %v307, %v307
      %v309 = vld [vmem:[%s3] sm:$0xff]
      %v310 = vld [vmem:[%s3 + $0x8] sm:$0xff]
      %v311 = vld [vmem:[%s3 + $0x10] sm:$0xff]
      %v312 = vld [vmem:[%s3 + $0x18] sm:$0xff]
      %v313 = vld [vmem:[%s3 + $0x20] sm:$0xff]
      %v314 = vld [vmem:[%s3 + $0x28] sm:$0xff]
      %v315 = vld [vmem:[%s3 + $0x30] sm:$0xff]
      %v316 = vld [vmem:[%s3 + $0x38] sm:$0xff]
      %v317 = vld [vmem:[%s4] sm:$0x3]
      %v319 = vlaneseq
      %v320 = vshrl.u32 %v319, 7
      %v321 = vsub.s32 0, %v320
      %v322 = vrot.slane %v317, %v321
      %v323 = vlaneseq
      %v324 = vshrl.u32 %v323, 7
      %v325 = vsub.s32 1, %v324
      %v326 = vrot.slane %v317, %v325
      %v337 = vunpack.c.l.b16 %v309
      %v338 = vunpack.c.h.b16 %v309
      %v339 = vunpack.c.l.b16 %v310
      %v340 = vunpack.c.h.b16 %v310
      %v341 = vunpack.c.l.b16 %v311
      %v342 = vunpack.c.h.b16 %v311
      %v343 = vunpack.c.l.b16 %v312
      %v344 = vunpack.c.h.b16 %v312
      %v345 = vunpack.c.l.b16 %v313
      %v346 = vunpack.c.h.b16 %v313
      %v347 = vunpack.c.l.b16 %v314
      %v348 = vunpack.c.h.b16 %v314
      %v349 = vunpack.c.l.b16 %v315
      %v350 = vunpack.c.h.b16 %v315
      %v351 = vunpack.c.l.b16 %v316
      %v352 = vunpack.c.h.b16 %v316
      %v353 = vpack.c.b16 %v339, %v337
      %v354 = vpack.c.b16 %v340, %v338
      %v355 = vpack.c.b16 %v343, %v341
      %v356 = vpack.c.b16 %v344, %v342
      %v357 = vpack.c.b16 %v347, %v345
      %v358 = vpack.c.b16 %v348, %v346
      %v359 = vpack.c.b16 %v351, %v349
      %v360 = vpack.c.b16 %v352, %v350
      %vm369 = vcmask 523264
      %v371 = vsel %vm369, %v308, 0
      %373 = vmatprep.subr.bf16.mxu0 %v354
      %374 = vmatpush1.bf16.msra.mxu0 %v353
      %375 = vmatprep.subr.bf16.mxu0 %v356
      %376 = vmatpush1.bf16.msra.mxu0 %v355
      %377 = vmatprep.subr.bf16.mxu0 %v358
      %378 = vmatpush1.bf16.msra.mxu0 %v357
      %379 = vmatprep.subr.bf16.mxu0 %v360
      %380 = vmatpush1.bf16.msra.mxu0 %v359
      %381 = vmatprep.subr.bf16.mxu0 0
      %382 = vmatpush1.bf16.msra.mxu0 0
      %383 = vmatprep.subr.bf16.mxu0 0
      %384 = vmatpush1.bf16.msra.mxu0 0
      %385 = vmatprep.subr.bf16.mxu0 0
      %386 = vmatpush1.bf16.msra.mxu0 0
      %387 = vmatprep.subr.bf16.mxu0 0
      %388 = vmatpush1.bf16.msra.mxu0 0
      %389 = vmatprep.subr.bf16.mxu0 0
      %390 = vmatpush1.bf16.msra.mxu0 0
      %391 = vmatprep.subr.bf16.mxu0 0
      %392 = vmatpush1.bf16.msra.mxu0 0
      %393 = vmatprep.subr.bf16.mxu0 0
      %394 = vmatpush1.bf16.msra.mxu0 0
      %395 = vmatprep.subr.bf16.mxu0 0
      %396 = vmatpush1.bf16.msra.mxu0 0
      %397 = vmatprep.subr.bf16.mxu0 0
      %398 = vmatpush1.bf16.msra.mxu0 0
      %399 = vmatprep.subr.bf16.mxu0 0
      %400 = vmatpush1.bf16.msra.mxu0 0
      %401 = vmatprep.subr.bf16.mxu0 0
      %402 = vmatpush1.bf16.msra.mxu0 0
      %403 = vmatprep.subr.bf16.mxu0 0
      %404 = vmatpush1.bf16.msra.mxu0 0
      %405 = vmatprep.mubr.bf16.mxu0 0
      %406 = vmatmul.mubr.bf16.gmra.mrb[0].mxu0 %v371
      %v407 = vpop.f32.mrb[0].mxu0
      %v408 = vadd.f32 %v322, %v407
      %v409 = vpop.f32.mrb[0].mxu0
      %v410 = vadd.f32 %v326, %v409
      %v411 = vpop.f32.mrb[0].mxu0
      %v412 = vpop.f32.mrb[0].mxu0
      %413 = vdwg.mxu0
      %v414 = vmul.f32 %v408, 0.25
      %v415 = vpack.c.bf16 %v414, %v414
      %v416 = vpack.c.bf16 %v408, %v408
      %v417 = vpack.c.bf16 %v410, %v410
      %419 = vrot.lane.b32.xlu0 %v416, 64
      %v420 = vpop.permute.xlu0 %419
      %vm421 = vcmask 130048
      %v423 = vsel %vm421, %v415, 0
      %v426 = vsel %vm421, %v420, 0
      %428 = vmatprep.subr.bf16.mxu0 0
      %429 = vmatpush1.bf16.xpose.msra.mxu0 %v426
      %430 = vmatprep.subr.bf16.mxu0 0
      %431 = vmatpush1.bf16.xpose.msra.mxu0 0
      %432 = vmatprep.subr.bf16.mxu0 0
      %433 = vmatpush1.bf16.xpose.msra.mxu0 0
      %434 = vmatprep.subr.bf16.mxu0 0
      %435 = vmatpush1.bf16.xpose.msra.mxu0 0
      %436 = vmatprep.subr.bf16.mxu0 0
      %437 = vmatpush1.bf16.xpose.msra.mxu0 0
      %438 = vmatprep.subr.bf16.mxu0 0
      %439 = vmatpush1.bf16.xpose.msra.mxu0 0
      %440 = vmatprep.subr.bf16.mxu0 0
      %441 = vmatpush1.bf16.xpose.msra.mxu0 0
      %442 = vmatprep.subr.bf16.mxu0 0
      %443 = vmatpush1.bf16.xpose.msra.mxu0 0
      %444 = vmatprep.subr.bf16.mxu0 0
      %445 = vmatpush1.bf16.xpose.msra.mxu0 0
      %446 = vmatprep.subr.bf16.mxu0 0
      %447 = vmatpush1.bf16.xpose.msra.mxu0 0
      %448 = vmatprep.subr.bf16.mxu0 0
      %449 = vmatpush1.bf16.xpose.msra.mxu0 0
      %450 = vmatprep.subr.bf16.mxu0 0
      %451 = vmatpush1.bf16.xpose.msra.mxu0 0
      %452 = vmatprep.subr.bf16.mxu0 0
      %453 = vmatpush1.bf16.xpose.msra.mxu0 0
      %454 = vmatprep.subr.bf16.mxu0 0
      %455 = vmatpush1.bf16.xpose.msra.mxu0 0
      %456 = vmatprep.subr.bf16.mxu0 0
      %457 = vmatpush1.bf16.xpose.msra.mxu0 0
      %458 = vmatprep.subr.bf16.mxu0 0
      %459 = vmatpush1.bf16.xpose.msra.mxu0 0
      %460 = vmatprep.mubr.bf16.mxu0 0
      %461 = vmatmul.mubr.bf16.gmra.mrb[0].mxu0 %v423
      %v462 = vpop.f32.mrb[0].mxu0
      %v463 = vadd.f32 0.0, %v462
      %v464 = vpop.f32.mrb[0].mxu0
      %v465 = vpop.f32.mrb[0].mxu0
      %v466 = vpop.f32.mrb[0].mxu0
      %467 = vdwg.mxu0
      %vm468 = vcmask 36864
      %v469 = vsel %vm468, %v463, -inf
      %470 = vmax.xlane.f32.xlu0 %v469
      %v471 = vpop.xlane.xlu0 %470
      %v472 = vsub.f32 %v463, %v471
      %v473 = vmul.f32 %v472, 1.442695
      %v474 = vpow.pop %v473
      %v475 = vsel %vm468, %v474, 0.0
      %476 = vadd.xlane.f32.xlu0 %v475
      %v477 = vpop.xlane.xlu0 %476
      %v478 = vrcp.pop %v477
      %v479 = vmul.f32 %v474, %v478
      %v480 = vpack.c.bf16 %v479, %v479
      %vm481 = vcmask 39936
      %v483 = vsel %vm481, %v480, 0
      %vm485 = vcmask 1041408
      %vm486 = vcmask 1042432
      %v487 = vsel %vm485, 4294967295, 65535
      %v488 = vsel %vm486, %v487, 0
      %v490 = vand.u32 %v417, %v488
      %492 = vmatprep.subr.bf16.mxu0 0
      %493 = vmatpush1.bf16.msra.mxu0 %v490
      %494 = vmatprep.subr.bf16.mxu0 0
      %495 = vmatpush1.bf16.msra.mxu0 0
      %496 = vmatprep.subr.bf16.mxu0 0
      %497 = vmatpush1.bf16.msra.mxu0 0
      %498 = vmatprep.subr.bf16.mxu0 0
      %499 = vmatpush1.bf16.msra.mxu0 0
      %500 = vmatprep.subr.bf16.mxu0 0
      %501 = vmatpush1.bf16.msra.mxu0 0
      %502 = vmatprep.subr.bf16.mxu0 0
      %503 = vmatpush1.bf16.msra.mxu0 0
      %504 = vmatprep.subr.bf16.mxu0 0
      %505 = vmatpush1.bf16.msra.mxu0 0
      %506 = vmatprep.subr.bf16.mxu0 0
      %507 = vmatpush1.bf16.msra.mxu0 0
      %508 = vmatprep.subr.bf16.mxu0 0
      %509 = vmatpush1.bf16.msra.mxu0 0
      %510 = vmatprep.subr.bf16.mxu0 0
      %511 = vmatpush1.bf16.msra.mxu0 0
      %512 = vmatprep.subr.bf16.mxu0 0
      %513 = vmatpush1.bf16.msra.mxu0 0
      %514 = vmatprep.subr.bf16.mxu0 0
      %515 = vmatpush1.bf16.msra.mxu0 0
      %516 = vmatprep.subr.bf16.mxu0 0
      %517 = vmatpush1.bf16.msra.mxu0 0
      %518 = vmatprep.subr.bf16.mxu0 0
      %519 = vmatpush1.bf16.msra.mxu0 0
      %520 = vmatprep.subr.bf16.mxu0 0
      %521 = vmatpush1.bf16.msra.mxu0 0
      %522 = vmatprep.subr.bf16.mxu0 0
      %523 = vmatpush1.bf16.msra.mxu0 0
      %524 = vmatprep.mubr.bf16.mxu0 0
      %525 = vmatmul.mubr.bf16.gmra.mrb[0].mxu0 %v483
      %v526 = vpop.f32.mrb[0].mxu0
      %v527 = vadd.f32 0.0, %v526
      %v528 = vpop.f32.mrb[0].mxu0
      %v529 = vpop.f32.mrb[0].mxu0
      %v530 = vpop.f32.mrb[0].mxu0
      %531 = vdwg.mxu0
      %533 = vrot.lane.b32.xlu0 %v415, 112
      %v534 = vpop.permute.xlu0 %533
      %535 = vrot.lane.b32.xlu0 %v416, 48
      %v536 = vpop.permute.xlu0 %535
      %v538 = vsel %vm421, %v534, 0
      %v541 = vsel %vm421, %v536, 0
      %543 = vmatprep.subr.bf16.mxu0 0
      %544 = vmatpush1.bf16.xpose.msra.mxu0 %v541
      %545 = vmatprep.subr.bf16.mxu0 0
      %546 = vmatpush1.bf16.xpose.msra.mxu0 0
      %547 = vmatprep.subr.bf16.mxu0 0
      %548 = vmatpush1.bf16.xpose.msra.mxu0 0
      %549 = vmatprep.subr.bf16.mxu0 0
      %550 = vmatpush1.bf16.xpose.msra.mxu0 0
      %551 = vmatprep.subr.bf16.mxu0 0
      %552 = vmatpush1.bf16.xpose.msra.mxu0 0
      %553 = vmatprep.subr.bf16.mxu0 0
      %554 = vmatpush1.bf16.xpose.msra.mxu0 0
      %555 = vmatprep.subr.bf16.mxu0 0
      %556 = vmatpush1.bf16.xpose.msra.mxu0 0
      %557 = vmatprep.subr.bf16.mxu0 0
      %558 = vmatpush1.bf16.xpose.msra.mxu0 0
      %559 = vmatprep.subr.bf16.mxu0 0
      %560 = vmatpush1.bf16.xpose.msra.mxu0 0
      %561 = vmatprep.subr.bf16.mxu0 0
      %562 = vmatpush1.bf16.xpose.msra.mxu0 0
      %563 = vmatprep.subr.bf16.mxu0 0
      %564 = vmatpush1.bf16.xpose.msra.mxu0 0
      %565 = vmatprep.subr.bf16.mxu0 0
      %566 = vmatpush1.bf16.xpose.msra.mxu0 0
      %567 = vmatprep.subr.bf16.mxu0 0
      %568 = vmatpush1.bf16.xpose.msra.mxu0 0
      %569 = vmatprep.subr.bf16.mxu0 0
      %570 = vmatpush1.bf16.xpose.msra.mxu0 0
      %571 = vmatprep.subr.bf16.mxu0 0
      %572 = vmatpush1.bf16.xpose.msra.mxu0 0
      %573 = vmatprep.subr.bf16.mxu0 0
      %574 = vmatpush1.bf16.xpose.msra.mxu0 0
      %575 = vmatprep.mubr.bf16.mxu0 0
      %576 = vmatmul.mubr.bf16.gmra.mrb[0].mxu0 %v538
      %v577 = vpop.f32.mrb[0].mxu0
      %v578 = vadd.f32 0.0, %v577
      %v579 = vpop.f32.mrb[0].mxu0
      %v580 = vpop.f32.mrb[0].mxu0
      %v581 = vpop.f32.mrb[0].mxu0
      %582 = vdwg.mxu0
      %v583 = vsel %vm468, %v578, -inf
      %584 = vmax.xlane.f32.xlu0 %v583
      %v585 = vpop.xlane.xlu0 %584
      %v586 = vsub.f32 %v578, %v585
      %v587 = vmul.f32 %v586, 1.442695
      %v588 = vpow.pop %v587
      %v589 = vsel %vm468, %v588, 0.0
      %590 = vadd.xlane.f32.xlu0 %v589
      %v591 = vpop.xlane.xlu0 %590
      %v592 = vrcp.pop %v591
      %v593 = vmul.f32 %v588, %v592
      %v594 = vpack.c.bf16 %v593, %v593
      %596 = vrot.lane.b32.xlu0 %v417, 112
      %v597 = vpop.permute.xlu0 %596
      %v599 = vsel %vm481, %v594, 0
      %v602 = vand.u32 %v597, %v488
      %604 = vmatprep.subr.bf16.mxu0 0
      %605 = vmatpush1.bf16.msra.mxu0 %v602
      %606 = vmatprep.subr.bf16.mxu0 0
      %607 = vmatpush1.bf16.msra.mxu0 0
      %608 = vmatprep.subr.bf16.mxu0 0
      %609 = vmatpush1.bf16.msra.mxu0 0
      %610 = vmatprep.subr.bf16.mxu0 0
      %611 = vmatpush1.bf16.msra.mxu0 0
      %612 = vmatprep.subr.bf16.mxu0 0
      %613 = vmatpush1.bf16.msra.mxu0 0
      %614 = vmatprep.subr.bf16.mxu0 0
      %615 = vmatpush1.bf16.msra.mxu0 0
      %616 = vmatprep.subr.bf16.mxu0 0
      %617 = vmatpush1.bf16.msra.mxu0 0
      %618 = vmatprep.subr.bf16.mxu0 0
      %619 = vmatpush1.bf16.msra.mxu0 0
      %620 = vmatprep.subr.bf16.mxu0 0
      %621 = vmatpush1.bf16.msra.mxu0 0
      %622 = vmatprep.subr.bf16.mxu0 0
      %623 = vmatpush1.bf16.msra.mxu0 0
      %624 = vmatprep.subr.bf16.mxu0 0
      %625 = vmatpush1.bf16.msra.mxu0 0
      %626 = vmatprep.subr.bf16.mxu0 0
      %627 = vmatpush1.bf16.msra.mxu0 0
      %628 = vmatprep.subr.bf16.mxu0 0
      %629 = vmatpush1.bf16.msra.mxu0 0
      %630 = vmatprep.subr.bf16.mxu0 0
      %631 = vmatpush1.bf16.msra.mxu0 0
      %632 = vmatprep.subr.bf16.mxu0 0
      %633 = vmatpush1.bf16.msra.mxu0 0
      %634 = vmatprep.subr.bf16.mxu0 0
      %635 = vmatpush1.bf16.msra.mxu0 0
      %636 = vmatprep.mubr.bf16.mxu0 0
      %637 = vmatmul.mubr.bf16.gmra.mrb[0].mxu0 %v599
      %v638 = vpop.f32.mrb[0].mxu0
      %v639 = vadd.f32 0.0, %v638
      %v640 = vpop.f32.mrb[0].mxu0
      %v641 = vpop.f32.mrb[0].mxu0
      %v642 = vpop.f32.mrb[0].mxu0
      %643 = vdwg.mxu0
      %644 = vrot.lane.b32.xlu0 %v415, 96
      %v645 = vpop.permute.xlu0 %644
      %646 = vrot.lane.b32.xlu0 %v416, 32
      %v647 = vpop.permute.xlu0 %646
      %v649 = vsel %vm421, %v645, 0
      %v652 = vsel %vm421, %v647, 0
      %654 = vmatprep.subr.bf16.mxu0 0
      %655 = vmatpush1.bf16.xpose.msra.mxu0 %v652
      %656 = vmatprep.subr.bf16.mxu0 0
      %657 = vmatpush1.bf16.xpose.msra.mxu0 0
      %658 = vmatprep.subr.bf16.mxu0 0
      %659 = vmatpush1.bf16.xpose.msra.mxu0 0
      %660 = vmatprep.subr.bf16.mxu0 0
      %661 = vmatpush1.bf16.xpose.msra.mxu0 0
      %662 = vmatprep.subr.bf16.mxu0 0
      %663 = vmatpush1.bf16.xpose.msra.mxu0 0
      %664 = vmatprep.subr.bf16.mxu0 0
      %665 = vmatpush1.bf16.xpose.msra.mxu0 0
      %666 = vmatprep.subr.bf16.mxu0 0
      %667 = vmatpush1.bf16.xpose.msra.mxu0 0
      %668 = vmatprep.subr.bf16.mxu0 0
      %669 = vmatpush1.bf16.xpose.msra.mxu0 0
      %670 = vmatprep.subr.bf16.mxu0 0
      %671 = vmatpush1.bf16.xpose.msra.mxu0 0
      %672 = vmatprep.subr.bf16.mxu0 0
      %673 = vmatpush1.bf16.xpose.msra.mxu0 0
      %674 = vmatprep.subr.bf16.mxu0 0
      %675 = vmatpush1.bf16.xpose.msra.mxu0 0
      %676 = vmatprep.subr.bf16.mxu0 0
      %677 = vmatpush1.bf16.xpose.msra.mxu0 0
      %678 = vmatprep.subr.bf16.mxu0 0
      %679 = vmatpush1.bf16.xpose.msra.mxu0 0
      %680 = vmatprep.subr.bf16.mxu0 0
      %681 = vmatpush1.bf16.xpose.msra.mxu0 0
      %682 = vmatprep.subr.bf16.mxu0 0
      %683 = vmatpush1.bf16.xpose.msra.mxu0 0
      %684 = vmatprep.subr.bf16.mxu0 0
      %685 = vmatpush1.bf16.xpose.msra.mxu0 0
      %686 = vmatprep.mubr.bf16.mxu0 0
      %687 = vmatmul.mubr.bf16.gmra.mrb[0].mxu0 %v649
      %v688 = vpop.f32.mrb[0].mxu0
      %v689 = vadd.f32 0.0, %v688
      %v690 = vpop.f32.mrb[0].mxu0
      %v691 = vpop.f32.mrb[0].mxu0
      %v692 = vpop.f32.mrb[0].mxu0
      %693 = vdwg.mxu0
      %v694 = vsel %vm468, %v689, -inf
      %695 = vmax.xlane.f32.xlu0 %v694
      %v696 = vpop.xlane.xlu0 %695
      %v697 = vsub.f32 %v689, %v696
      %v698 = vmul.f32 %v697, 1.442695
      %v699 = vpow.pop %v698
      %v700 = vsel %vm468, %v699, 0.0
      %701 = vadd.xlane.f32.xlu0 %v700
      %v702 = vpop.xlane.xlu0 %701
      %v703 = vrcp.pop %v702
      %v704 = vmul.f32 %v699, %v703
      %v705 = vpack.c.bf16 %v704, %v704
      %706 = vrot.lane.b32.xlu0 %v417, 96
      %v707 = vpop.permute.xlu0 %706
      %v709 = vsel %vm481, %v705, 0
      %v712 = vand.u32 %v707, %v488
      %714 = vmatprep.subr.bf16.mxu0 0
      %715 = vmatpush1.bf16.msra.mxu0 %v712
      %716 = vmatprep.subr.bf16.mxu0 0
      %717 = vmatpush1.bf16.msra.mxu0 0
      %718 = vmatprep.subr.bf16.mxu0 0
      %719 = vmatpush1.bf16.msra.mxu0 0
      %720 = vmatprep.subr.bf16.mxu0 0
      %721 = vmatpush1.bf16.msra.mxu0 0
      %722 = vmatprep.subr.bf16.mxu0 0
      %723 = vmatpush1.bf16.msra.mxu0 0
      %724 = vmatprep.subr.bf16.mxu0 0
      %725 = vmatpush1.bf16.msra.mxu0 0
      %726 = vmatprep.subr.bf16.mxu0 0
      %727 = vmatpush1.bf16.msra.mxu0 0
      %728 = vmatprep.subr.bf16.mxu0 0
      %729 = vmatpush1.bf16.msra.mxu0 0
      %730 = vmatprep.subr.bf16.mxu0 0
      %731 = vmatpush1.bf16.msra.mxu0 0
      %732 = vmatprep.subr.bf16.mxu0 0
      %733 = vmatpush1.bf16.msra.mxu0 0
      %734 = vmatprep.subr.bf16.mxu0 0
      %735 = vmatpush1.bf16.msra.mxu0 0
      %736 = vmatprep.subr.bf16.mxu0 0
      %737 = vmatpush1.bf16.msra.mxu0 0
      %738 = vmatprep.subr.bf16.mxu0 0
      %739 = vmatpush1.bf16.msra.mxu0 0
      %740 = vmatprep.subr.bf16.mxu0 0
      %741 = vmatpush1.bf16.msra.mxu0 0
      %742 = vmatprep.subr.bf16.mxu0 0
      %743 = vmatpush1.bf16.msra.mxu0 0
      %744 = vmatprep.subr.bf16.mxu0 0
      %745 = vmatpush1.bf16.msra.mxu0 0
      %746 = vmatprep.mubr.bf16.mxu0 0
      %747 = vmatmul.mubr.bf16.gmra.mrb[0].mxu0 %v709
      %v748 = vpop.f32.mrb[0].mxu0
      %v749 = vadd.f32 0.0, %v748
      %v750 = vpop.f32.mrb[0].mxu0
      %v751 = vpop.f32.mrb[0].mxu0
      %v752 = vpop.f32.mrb[0].mxu0
      %753 = vdwg.mxu0
      %754 = vrot.lane.b32.xlu0 %v415, 80
      %v755 = vpop.permute.xlu0 %754
      %756 = vrot.lane.b32.xlu0 %v416, 16
      %v757 = vpop.permute.xlu0 %756
      %v759 = vsel %vm421, %v755, 0
      %v762 = vsel %vm421, %v757, 0
      %764 = vmatprep.subr.bf16.mxu0 0
      %765 = vmatpush1.bf16.xpose.msra.mxu0 %v762
      %766 = vmatprep.subr.bf16.mxu0 0
      %767 = vmatpush1.bf16.xpose.msra.mxu0 0
      %768 = vmatprep.subr.bf16.mxu0 0
      %769 = vmatpush1.bf16.xpose.msra.mxu0 0
      %770 = vmatprep.subr.bf16.mxu0 0
      %771 = vmatpush1.bf16.xpose.msra.mxu0 0
      %772 = vmatprep.subr.bf16.mxu0 0
      %773 = vmatpush1.bf16.xpose.msra.mxu0 0
      %774 = vmatprep.subr.bf16.mxu0 0
      %775 = vmatpush1.bf16.xpose.msra.mxu0 0
      %776 = vmatprep.subr.bf16.mxu0 0
      %777 = vmatpush1.bf16.xpose.msra.mxu0 0
      %778 = vmatprep.subr.bf16.mxu0 0
      %779 = vmatpush1.bf16.xpose.msra.mxu0 0
      %780 = vmatprep.subr.bf16.mxu0 0
      %781 = vmatpush1.bf16.xpose.msra.mxu0 0
      %782 = vmatprep.subr.bf16.mxu0 0
      %783 = vmatpush1.bf16.xpose.msra.mxu0 0
      %784 = vmatprep.subr.bf16.mxu0 0
      %785 = vmatpush1.bf16.xpose.msra.mxu0 0
      %786 = vmatprep.subr.bf16.mxu0 0
      %787 = vmatpush1.bf16.xpose.msra.mxu0 0
      %788 = vmatprep.subr.bf16.mxu0 0
      %789 = vmatpush1.bf16.xpose.msra.mxu0 0
      %790 = vmatprep.subr.bf16.mxu0 0
      %791 = vmatpush1.bf16.xpose.msra.mxu0 0
      %792 = vmatprep.subr.bf16.mxu0 0
      %793 = vmatpush1.bf16.xpose.msra.mxu0 0
      %794 = vmatprep.subr.bf16.mxu0 0
      %795 = vmatpush1.bf16.xpose.msra.mxu0 0
      %796 = vmatprep.mubr.bf16.mxu0 0
      %797 = vmatmul.mubr.bf16.gmra.mrb[0].mxu0 %v759
      %v798 = vpop.f32.mrb[0].mxu0
      %v799 = vadd.f32 0.0, %v798
      %v800 = vpop.f32.mrb[0].mxu0
      %v801 = vpop.f32.mrb[0].mxu0
      %v802 = vpop.f32.mrb[0].mxu0
      %803 = vdwg.mxu0
      %v804 = vsel %vm468, %v799, -inf
      %805 = vmax.xlane.f32.xlu0 %v804
      %v806 = vpop.xlane.xlu0 %805
      %v807 = vsub.f32 %v799, %v806
      %v808 = vmul.f32 %v807, 1.442695
      %v809 = vpow.pop %v808
      %v810 = vsel %vm468, %v809, 0.0
      %811 = vadd.xlane.f32.xlu0 %v810
      %v812 = vpop.xlane.xlu0 %811
      %v813 = vrcp.pop %v812
      %v814 = vmul.f32 %v809, %v813
      %v815 = vpack.c.bf16 %v814, %v814
      %816 = vrot.lane.b32.xlu0 %v417, 80
      %v817 = vpop.permute.xlu0 %816
      %v819 = vsel %vm481, %v815, 0
      %v822 = vand.u32 %v817, %v488
      %824 = vmatprep.subr.bf16.mxu0 0
      %825 = vmatpush1.bf16.msra.mxu0 %v822
      %826 = vmatprep.subr.bf16.mxu0 0
      %827 = vmatpush1.bf16.msra.mxu0 0
      %828 = vmatprep.subr.bf16.mxu0 0
      %829 = vmatpush1.bf16.msra.mxu0 0
      %830 = vmatprep.subr.bf16.mxu0 0
      %831 = vmatpush1.bf16.msra.mxu0 0
      %832 = vmatprep.subr.bf16.mxu0 0
      %833 = vmatpush1.bf16.msra.mxu0 0
      %834 = vmatprep.subr.bf16.mxu0 0
      %835 = vmatpush1.bf16.msra.mxu0 0
      %836 = vmatprep.subr.bf16.mxu0 0
      %837 = vmatpush1.bf16.msra.mxu0 0
      %838 = vmatprep.subr.bf16.mxu0 0
      %839 = vmatpush1.bf16.msra.mxu0 0
      %840 = vmatprep.subr.bf16.mxu0 0
      %841 = vmatpush1.bf16.msra.mxu0 0
      %842 = vmatprep.subr.bf16.mxu0 0
      %843 = vmatpush1.bf16.msra.mxu0 0
      %844 = vmatprep.subr.bf16.mxu0 0
      %845 = vmatpush1.bf16.msra.mxu0 0
      %846 = vmatprep.subr.bf16.mxu0 0
      %847 = vmatpush1.bf16.msra.mxu0 0
      %848 = vmatprep.subr.bf16.mxu0 0
      %849 = vmatpush1.bf16.msra.mxu0 0
      %850 = vmatprep.subr.bf16.mxu0 0
      %851 = vmatpush1.bf16.msra.mxu0 0
      %852 = vmatprep.subr.bf16.mxu0 0
      %853 = vmatpush1.bf16.msra.mxu0 0
      %854 = vmatprep.subr.bf16.mxu0 0
      %855 = vmatpush1.bf16.msra.mxu0 0
      %856 = vmatprep.mubr.bf16.mxu0 0
      %857 = vmatmul.mubr.bf16.gmra.mrb[0].mxu0 %v819
      %v858 = vpop.f32.mrb[0].mxu0
      %v859 = vadd.f32 0.0, %v858
      %v860 = vpop.f32.mrb[0].mxu0
      %v861 = vpop.f32.mrb[0].mxu0
      %v862 = vpop.f32.mrb[0].mxu0
      %863 = vdwg.mxu0
      %865 = vrot.lane.b32.xlu0 %v639, 16
      %v866 = vpop.permute.xlu0 %865
      %869 = vrot.lane.b32.xlu0 %v749, 32
      %v870 = vpop.permute.xlu0 %869
      %873 = vrot.lane.b32.xlu0 %v859, 48
      %v874 = vpop.permute.xlu0 %873
      %v876 = vsel %vm421, %v527, %v866
      %vm877 = vcmask 261120
      %v878 = vsel %vm877, %v876, %v870
      %vm879 = vcmask 392192
      %v880 = vsel %vm879, %v878, %v874
      %v881 = vpack.c.bf16 %v880, %v880
      %v882 = vld [vmem:[%s5] sm:$0xf]
      %v883 = vld [vmem:[%s5 + $0x4] sm:$0xf]
      %v884 = vld [vmem:[%s5 + $0x8] sm:$0xf]
      %v885 = vld [vmem:[%s5 + $0xc] sm:$0xf]
      %v886 = vld [vmem:[%s5 + $0x10] sm:$0xf]
      %v887 = vld [vmem:[%s5 + $0x14] sm:$0xf]
      %v888 = vld [vmem:[%s5 + $0x18] sm:$0xf]
      %v889 = vld [vmem:[%s5 + $0x1c] sm:$0xf]
      %v890 = vld [vmem:[%s6] sm:$0x1]
      %v892 = vlaneseq
      %v893 = vshrl.u32 %v892, 7
      %v894 = vsub.s32 0, %v893
      %v895 = vrot.slane %v890, %v894
      %v905 = vunpack.c.l.b16 %v882
      %v906 = vunpack.c.l.b16 %v883
      %v907 = vunpack.c.l.b16 %v884
      %v908 = vunpack.c.l.b16 %v885
      %v909 = vunpack.c.l.b16 %v886
      %v910 = vunpack.c.l.b16 %v887
      %v911 = vunpack.c.l.b16 %v888
      %v912 = vunpack.c.l.b16 %v889
      %v913 = vpack.c.b16 %v906, %v905
      %v914 = vpack.c.b16 %v908, %v907
      %v915 = vpack.c.b16 %v910, %v909
      %v916 = vpack.c.b16 %v912, %v911
      %v922 = vsel %vm369, %v881, 0
      %924 = vmatprep.subr.bf16.mxu0 0
      %925 = vmatpush1.bf16.msra.mxu0 %v913
      %926 = vmatprep.subr.bf16.mxu0 0
      %927 = vmatpush1.bf16.msra.mxu0 %v914
      %928 = vmatprep.subr.bf16.mxu0 0
      %929 = vmatpush1.bf16.msra.mxu0 %v915
      %930 = vmatprep.subr.bf16.mxu0 0
      %931 = vmatpush1.bf16.msra.mxu0 %v916
      %932 = vmatprep.subr.bf16.mxu0 0
      %933 = vmatpush1.bf16.msra.mxu0 0
      %934 = vmatprep.subr.bf16.mxu0 0
      %935 = vmatpush1.bf16.msra.mxu0 0
      %936 = vmatprep.subr.bf16.mxu0 0
      %937 = vmatpush1.bf16.msra.mxu0 0
      %938 = vmatprep.subr.bf16.mxu0 0
      %939 = vmatpush1.bf16.msra.mxu0 0
      %940 = vmatprep.subr.bf16.mxu0 0
      %941 = vmatpush1.bf16.msra.mxu0 0
      %942 = vmatprep.subr.bf16.mxu0 0
      %943 = vmatpush1.bf16.msra.mxu0 0
      %944 = vmatprep.subr.bf16.mxu0 0
      %945 = vmatpush1.bf16.msra.mxu0 0
      %946 = vmatprep.subr.bf16.mxu0 0
      %947 = vmatpush1.bf16.msra.mxu0 0
      %948 = vmatprep.subr.bf16.mxu0 0
      %949 = vmatpush1.bf16.msra.mxu0 0
      %950 = vmatprep.subr.bf16.mxu0 0
      %951 = vmatpush1.bf16.msra.mxu0 0
      %952 = vmatprep.subr.bf16.mxu0 0
      %953 = vmatpush1.bf16.msra.mxu0 0
      %954 = vmatprep.subr.bf16.mxu0 0
      %955 = vmatpush1.bf16.msra.mxu0 0
      %956 = vmatprep.mubr.bf16.mxu0 0
      %957 = vmatmul.mubr.bf16.gmra.mrb[0].mxu0 %v922
      %v958 = vpop.f32.mrb[0].mxu0
      %v959 = vadd.f32 %v895, %v958
      %v960 = vpop.f32.mrb[0].mxu0
      %v961 = vpop.f32.mrb[0].mxu0
      %v962 = vpop.f32.mrb[0].mxu0
      %963 = vdwg.mxu0
      %v964 = vadd.f32 %v959, %v276
      %v965 = vpack.c.bf16 %v964, %v964
      %vm966 = vcmask 518144
      %vm967 = vsmask.f32 2304
      %vm968 = vmand %vm966, %vm967
      %v969 = vld [vmem:[%s273] sm:$0x7]
      %v970 = vsel %vm968, %v965, %v969
      %971 = vst [vmem:[%s273] sm:$0x7] %v970
      %p972 = scmp.lt.s32.totalorder %s18, 27
      %s973 = scalar_select %p972, %s18, 27
      %s974 = smul.addr %s973, 4
      %s975 = scalar_lea.vmem %s7, %s974
      // Predicated region
      $region49: #{run.4} parent=47 // pred_check
        %p976 = pneg %p188
      $region50: #{run.4} parent=47 // pred_check_branch
        %978 = sbr.rel (%p976) target = $region52
      $region51: #{run.4} parent=47 // pred_region
        _
      $region52: #{run.4} parent=47 // pred_fallthru
        _
    $region48: #{run.4} parent=5 // pred_fallthru
      _
    %p979 = scmp.le.s32.totalorder 2, %s13
    // Predicated region
    $region53: #{run.4} parent=5 // pred_check
      %p980 = pneg %p979
    $region54: #{run.4} parent=5 // pred_check_branch
      %982 = sbr.rel (%p980) target = $region56
    $region55: #{run.4} parent=5 // pred_region
      %s983 = ssub.s32 %s13, 2
      // Predicated region
      $region57: #{run.4} parent=55 // pred_check
        %p984 = pneg %p194
      $region58: #{run.4} parent=55 // pred_check_branch
        %986 = sbr.rel (%p984) target = $region60
      $region59: #{run.4} parent=55 // pred_region
        %p987 = scmp.lt.s32.totalorder %s19, 27
        %s988 = scalar_select %p987, %s19, 27
        %s989 = smul.addr %s988, 4
        %s990 = scalar_lea.vmem %s7, %s989
      $region60: #{run.4} parent=55 // pred_fallthru
        _
    $region56: #{run.4} parent=5 // pred_fallthru
      _
  $region6: #{run.4} parent=0 // loop_footer
    %s17 = sadd.s32 1, %s13
  $region7: #{run.4} parent=0 // loop_footer_branch
    %12 = sbr.rel target = $region3
  $region8: #{run.4} parent=0 // loop_exit
    _

</llo_original>
